<compile_context>
chip_gen: v7x
topology: tpu7x:2x2x1
jax: 0.10.0
libtpu: 0.0.40
codegen_flags: <defaults>
</compile_context>

<pallas_src>
import jax
import jax.numpy as jnp
from jax.experimental import pallas as pl
from jax.experimental.pallas import tpu as pltpu


def _lstm_kernel(x_ref, wih_ref, whh_ref, b_ref,
                 out_ref, hn_ref, cn_ref,
                 xp_sc):
    # x_ref:   (T*B, I)   time-major, flattened
    # wih_ref: (I, 4H)    whh_ref: (H, 4H)    b_ref: (1, 4H)  (= b_ih + b_hh)
    # out_ref: (T, B, H)  hn_ref / cn_ref: (B, H)
    # xp_sc:   (T*B, 4H)  VMEM scratch holding the precomputed input projection
    T, B, H = out_ref.shape

    # ---- Phase 1: input projection for ALL timesteps in one MXU matmul. ----
    xp_sc[...] = (
        jnp.dot(x_ref[...], wih_ref[...], preferred_element_type=jnp.float32)
        + b_ref[...]
    )

    whh = whh_ref[...]  # recurrent weights loaded once, stay resident

    # ---- Phase 2: serial recurrence, fully unrolled (T small & static). ----
    def step(t, carry):
        h, c = carry
        row = pl.multiple_of(t * B, B)
        # gates: (B, 4H) in PyTorch order [i, f, g, o]
        gates = xp_sc[pl.ds(row, B), :] + jnp.dot(
            h, whh, preferred_element_type=jnp.float32)
        # NOTE: with 4H == 128 these 32-lane slices cut inside one vreg; cheap at
        # H=32 and they become tile-aligned automatically once H >= 128.
        i_g = jax.nn.sigmoid(gates[:, 0 * H:1 * H])
        f_g = jax.nn.sigmoid(gates[:, 1 * H:2 * H])
        g_g = jnp.tanh(gates[:, 2 * H:3 * H])
        o_g = jax.nn.sigmoid(gates[:, 3 * H:4 * H])
        c_new = f_g * c + i_g * g_g
        h_new = o_g * jnp.tanh(c_new)
        # VMEM store into the resident output block; HBM writeback happens once.
        out_ref[t] = h_new.astype(out_ref.dtype)
        return h_new, c_new

    h0 = jnp.zeros((B, H), jnp.float32)
    c0 = jnp.zeros((B, H), jnp.float32)
    h_fin, c_fin = jax.lax.fori_loop(0, T, step, (h0, c0), unroll=True)

    # Final states written exactly once.
    hn_ref[...] = h_fin.astype(hn_ref.dtype)
    cn_ref[...] = c_fin.astype(cn_ref.dtype)


def encoder_rnn_forward(signal, w_ih, w_hh, b_ih, b_hh):
    """signal: (B, T, I) float32; weights in PyTorch nn.LSTM layout:
       w_ih: (4H, I), w_hh: (4H, H), b_ih/b_hh: (4H,)."""
    B, T, I = signal.shape
    H = w_hh.shape[1]

    # Time-major, flattened to (T*B, I): the in-kernel input projection is one
    # dense matmul and each timestep's projected rows are a contiguous sublane
    # slice of the scratch.  (Input is ~4 KiB here; pure layout plumbing.)
    x_tm = jnp.transpose(signal, (1, 0, 2)).reshape(T * B, I)
    wih_t = jnp.transpose(w_ih)                 # (I, 4H)
    whh_t = jnp.transpose(w_hh)                 # (H, 4H)
    bias = (b_ih + b_hh).reshape(1, 4 * H)      # (1, 4H)

    out_tm, h_n, c_n = pl.pallas_call(
        _lstm_kernel,
        out_shape=(
            jax.ShapeDtypeStruct((T, B, H), signal.dtype),
            jax.ShapeDtypeStruct((B, H), signal.dtype),
            jax.ShapeDtypeStruct((B, H), signal.dtype),
        ),
        in_specs=[pl.BlockSpec(memory_space=pltpu.MemorySpace.VMEM)
                  for _ in range(4)],
        out_specs=(
            pl.BlockSpec(memory_space=pltpu.MemorySpace.VMEM),
            pl.BlockSpec(memory_space=pltpu.MemorySpace.VMEM),
            pl.BlockSpec(memory_space=pltpu.MemorySpace.VMEM),
        ),
        scratch_shapes=[pltpu.VMEM((T * B, 4 * H), jnp.float32)],
    )(x_tm, wih_t, whh_t, bias)

    output = jnp.transpose(out_tm, (1, 0, 2))   # (T, B, H) -> (B, T, H)
    return output, (h_n[None], c_n[None])       # match PyTorch (1, B, H)


def _lstm_ref(signal, w_ih, w_hh, b_ih, b_hh):
    """Pure-JAX reference (lax.scan) matching torch.nn.LSTM semantics."""
    B, T, I = signal.shape
    H = w_hh.shape[1]

    def step(carry, x_t):
        h, c = carry
        gates = x_t @ w_ih.T + h @ w_hh.T + b_ih + b_hh
        i = jax.nn.sigmoid(gates[:, 0 * H:1 * H])
        f = jax.nn.sigmoid(gates[:, 1 * H:2 * H])
        g = jnp.tanh(gates[:, 2 * H:3 * H])
        o = jax.nn.sigmoid(gates[:, 3 * H:4 * H])
        c = f * c + i * g
        h = o * jnp.tanh(c)
        return (h, c), h

    init = (jnp.zeros((B, H), signal.dtype), jnp.zeros((B, H), signal.dtype))
    (h, c), ys = jax.lax.scan(step, init, jnp.transpose(signal, (1, 0, 2)))
    return jnp.transpose(ys, (1, 0, 2)), (h[None], c[None])


if __name__ == "__main__":
    B, T, INPUT_SIZE, HIDDEN_SIZE = 2, 8, 16, 32

    key = jax.random.PRNGKey(0)
    k_sig, k_wih, k_whh, k_bih, k_bhh = jax.random.split(key, 5)

    # PyTorch-style init: U(-1/sqrt(H), 1/sqrt(H)), gate order [i, f, g, o].
    bound = 1.0 / (HIDDEN_SIZE ** 0.5)
    signal = jax.random.normal(k_sig, (B, T, INPUT_SIZE), dtype=jnp.float32)
    w_ih = jax.random.uniform(k_wih, (4 * HIDDEN_SIZE, INPUT_SIZE),
                              minval=-bound, maxval=bound, dtype=jnp.float32)
    w_hh = jax.random.uniform(k_whh, (4 * HIDDEN_SIZE, HIDDEN_SIZE),
                              minval=-bound, maxval=bound, dtype=jnp.float32)
    b_ih = jax.random.uniform(k_bih, (4 * HIDDEN_SIZE,),
                              minval=-bound, maxval=bound, dtype=jnp.float32)
    b_hh = jax.random.uniform(k_bhh, (4 * HIDDEN_SIZE,),
                              minval=-bound, maxval=bound, dtype=jnp.float32)

    output, (h_n, c_n) = encoder_rnn_forward(signal, w_ih, w_hh, b_ih, b_hh)
    jax.block_until_ready((output, h_n, c_n))

    ref_out, (ref_h, ref_c) = _lstm_ref(signal, w_ih, w_hh, b_ih, b_hh)
    assert output.shape == (B, T, HIDDEN_SIZE)
    assert h_n.shape == (1, B, HIDDEN_SIZE) and c_n.shape == (1, B, HIDDEN_SIZE)
    assert jnp.allclose(output, ref_out, atol=1e-5, rtol=1e-5)
    assert jnp.allclose(h_n, ref_h, atol=1e-5, rtol=1e-5)
    assert jnp.allclose(c_n, ref_c, atol=1e-5, rtol=1e-5)

    print("KERNEL_OK")
</pallas_src>

<mosaic_0001>
module attributes {stable_mosaic.version = 11 : i64} {
  func.func @_lstm_kernel(%arg0: memref<16x16xf32, #tpu.memory_space<vmem>>, %arg1: memref<16x128xf32, #tpu.memory_space<vmem>>, %arg2: memref<32x128xf32, #tpu.memory_space<vmem>>, %arg3: memref<1x128xf32, #tpu.memory_space<vmem>>, %arg4: memref<8x2x32xf32, #tpu.memory_space<vmem>>, %arg5: memref<2x32xf32, #tpu.memory_space<vmem>>, %arg6: memref<2x32xf32, #tpu.memory_space<vmem>>, %arg7: memref<16x128xf32, #tpu.memory_space<vmem>>) attributes {dimension_semantics = [], scalar_prefetch = 0 : i64, scratch_operands = 1 : i64, tpu.core_type = #tpu.core_type<tc>} {
    %c0 = arith.constant 0 : index
    %c0_0 = arith.constant 0 : index
    %0 = vector.load %arg0[%c0, %c0_0] : memref<16x16xf32, #tpu.memory_space<vmem>>, vector<16x16xf32>
    %c0_1 = arith.constant 0 : index
    %c0_2 = arith.constant 0 : index
    %1 = vector.load %arg1[%c0_1, %c0_2] : memref<16x128xf32, #tpu.memory_space<vmem>>, vector<16x128xf32>
    %cst = arith.constant dense<0.000000e+00> : vector<16x128xf32>
    %2 = tpu.matmul %0, %1, %cst {dimension_numbers = #tpu.dot_dimension_numbers<[1], [0], [0], [1], [0, 0, 1, 1], [], []>} : vector<16x16xf32>, vector<16x128xf32>, vector<16x128xf32> -> vector<16x128xf32>
    %c0_3 = arith.constant 0 : index
    %c0_4 = arith.constant 0 : index
    %3 = vector.load %arg3[%c0_3, %c0_4] : memref<1x128xf32, #tpu.memory_space<vmem>>, vector<1x128xf32>
    %4 = vector.broadcast %3 : vector<1x128xf32> to vector<16x128xf32>
    %5 = arith.addf %2, %4 : vector<16x128xf32>
    %c0_5 = arith.constant 0 : index
    %c0_6 = arith.constant 0 : index
    %6 = vector.load %arg7[%c0_5, %c0_6] : memref<16x128xf32, #tpu.memory_space<vmem>>, vector<16x128xf32>
    tpu.vector_store %arg7[%c0_5, %c0_6], %5 {strides = array<i32>} : memref<16x128xf32, #tpu.memory_space<vmem>>, vector<16x128xf32>,
    %c0_7 = arith.constant 0 : index
    %c0_8 = arith.constant 0 : index
    %7 = vector.load %arg2[%c0_7, %c0_8] : memref<32x128xf32, #tpu.memory_space<vmem>>, vector<32x128xf32>
    %cst_9 = arith.constant 0.000000e+00 : f32
    %8 = vector.broadcast %cst_9 : f32 to vector<2x32xf32>
    %cst_10 = arith.constant 0.000000e+00 : f32
    %9 = vector.broadcast %cst_10 : f32 to vector<2x32xf32>
    %c0_i32 = arith.constant 0 : i32
    %c2_i32 = arith.constant 2 : i32
    %10 = arith.muli %c0_i32, %c2_i32 : i32
    %11 = tpu.assume_multiple %10, 2 : i32
    %12 = arith.index_cast %11 : i32 to index
    %c0_11 = arith.constant 0 : index
    %13 = vector.load %arg7[%12, %c0_11] : memref<16x128xf32, #tpu.memory_space<vmem>>, vector<2x128xf32>
    %cst_12 = arith.constant dense<0.000000e+00> : vector<2x128xf32>
    %14 = tpu.matmul %8, %7, %cst_12 {dimension_numbers = #tpu.dot_dimension_numbers<[1], [0], [0], [1], [0, 0, 1, 1], [], []>} : vector<2x32xf32>, vector<32x128xf32>, vector<2x128xf32> -> vector<2x128xf32>
    %15 = arith.addf %13, %14 : vector<2x128xf32>
    %16 = vector.extract_strided_slice %15 {offsets = [0, 0], sizes = [2, 32], strides = [1, 1]} : vector<2x128xf32> to vector<2x32xf32>
    %17 = arith.negf %16 : vector<2x32xf32>
    %18 = math.exp %17 : vector<2x32xf32>
    %cst_13 = arith.constant 1.000000e+00 : f32
    %19 = vector.broadcast %cst_13 : f32 to vector<2x32xf32>
    %20 = arith.addf %19, %18 : vector<2x32xf32>
    %21 = arith.divf %19, %20 : vector<2x32xf32>
    %22 = vector.extract_strided_slice %15 {offsets = [0, 32], sizes = [2, 32], strides = [1, 1]} : vector<2x128xf32> to vector<2x32xf32>
    %23 = arith.negf %22 : vector<2x32xf32>
    %24 = math.exp %23 : vector<2x32xf32>
    %cst_14 = arith.constant 1.000000e+00 : f32
    %25 = vector.broadcast %cst_14 : f32 to vector<2x32xf32>
    %26 = arith.addf %25, %24 : vector<2x32xf32>
    %27 = arith.divf %25, %26 : vector<2x32xf32>
    %28 = vector.extract_strided_slice %15 {offsets = [0, 64], sizes = [2, 32], strides = [1, 1]} : vector<2x128xf32> to vector<2x32xf32>
    %29 = math.tanh %28 : vector<2x32xf32>
    %30 = vector.extract_strided_slice %15 {offsets = [0, 96], sizes = [2, 32], strides = [1, 1]} : vector<2x128xf32> to vector<2x32xf32>
    %31 = arith.negf %30 : vector<2x32xf32>
    %32 = math.exp %31 : vector<2x32xf32>
    %cst_15 = arith.constant 1.000000e+00 : f32
    %33 = vector.broadcast %cst_15 : f32 to vector<2x32xf32>
    %34 = arith.addf %33, %32 : vector<2x32xf32>
    %35 = arith.divf %33, %34 : vector<2x32xf32>
    %36 = arith.mulf %27, %9 : vector<2x32xf32>
    %37 = arith.mulf %21, %29 : vector<2x32xf32>
    %38 = arith.addf %36, %37 : vector<2x32xf32>
    %39 = math.tanh %38 : vector<2x32xf32>
    %40 = arith.mulf %35, %39 : vector<2x32xf32>
    %41 = arith.index_cast %c0_i32 : i32 to index
    %c0_16 = arith.constant 0 : index
    %c0_17 = arith.constant 0 : index
    %42 = vector.load %arg4[%41, %c0_16, %c0_17] : memref<8x2x32xf32, #tpu.memory_space<vmem>>, vector<1x2x32xf32>
    %43 = vector.shape_cast %42 : vector<1x2x32xf32> to vector<2x32xf32>
    %44 = vector.shape_cast %40 : vector<2x32xf32> to vector<1x2x32xf32>
    tpu.vector_store %arg4[%41, %c0_16, %c0_17], %44 {strides = array<i32>} : memref<8x2x32xf32, #tpu.memory_space<vmem>>, vector<1x2x32xf32>,
    %c1_i32 = arith.constant 1 : i32
    %c2_i32_18 = arith.constant 2 : i32
    %45 = arith.muli %c1_i32, %c2_i32_18 : i32
    %46 = tpu.assume_multiple %45, 2 : i32
    %47 = arith.index_cast %46 : i32 to index
    %c0_19 = arith.constant 0 : index
    %48 = vector.load %arg7[%47, %c0_19] : memref<16x128xf32, #tpu.memory_space<vmem>>, vector<2x128xf32>
    %cst_20 = arith.constant dense<0.000000e+00> : vector<2x128xf32>
    %49 = tpu.matmul %40, %7, %cst_20 {dimension_numbers = #tpu.dot_dimension_numbers<[1], [0], [0], [1], [0, 0, 1, 1], [], []>} : vector<2x32xf32>, vector<32x128xf32>, vector<2x128xf32> -> vector<2x128xf32>
    %50 = arith.addf %48, %49 : vector<2x128xf32>
    %51 = vector.extract_strided_slice %50 {offsets = [0, 0], sizes = [2, 32], strides = [1, 1]} : vector<2x128xf32> to vector<2x32xf32>
    %52 = arith.negf %51 : vector<2x32xf32>
    %53 = math.exp %52 : vector<2x32xf32>
    %cst_21 = arith.constant 1.000000e+00 : f32
    %54 = vector.broadcast %cst_21 : f32 to vector<2x32xf32>
    %55 = arith.addf %54, %53 : vector<2x32xf32>
    %56 = arith.divf %54, %55 : vector<2x32xf32>
    %57 = vector.extract_strided_slice %50 {offsets = [0, 32], sizes = [2, 32], strides = [1, 1]} : vector<2x128xf32> to vector<2x32xf32>
    %58 = arith.negf %57 : vector<2x32xf32>
    %59 = math.exp %58 : vector<2x32xf32>
    %cst_22 = arith.constant 1.000000e+00 : f32
    %60 = vector.broadcast %cst_22 : f32 to vector<2x32xf32>
    %61 = arith.addf %60, %59 : vector<2x32xf32>
    %62 = arith.divf %60, %61 : vector<2x32xf32>
    %63 = vector.extract_strided_slice %50 {offsets = [0, 64], sizes = [2, 32], strides = [1, 1]} : vector<2x128xf32> to vector<2x32xf32>
    %64 = math.tanh %63 : vector<2x32xf32>
    %65 = vector.extract_strided_slice %50 {offsets = [0, 96], sizes = [2, 32], strides = [1, 1]} : vector<2x128xf32> to vector<2x32xf32>
    %66 = arith.negf %65 : vector<2x32xf32>
    %67 = math.exp %66 : vector<2x32xf32>
    %cst_23 = arith.constant 1.000000e+00 : f32
    %68 = vector.broadcast %cst_23 : f32 to vector<2x32xf32>
    %69 = arith.addf %68, %67 : vector<2x32xf32>
    %70 = arith.divf %68, %69 : vector<2x32xf32>
    %71 = arith.mulf %62, %38 : vector<2x32xf32>
    %72 = arith.mulf %56, %64 : vector<2x32xf32>
    %73 = arith.addf %71, %72 : vector<2x32xf32>
    %74 = math.tanh %73 : vector<2x32xf32>
    %75 = arith.mulf %70, %74 : vector<2x32xf32>
    %76 = arith.index_cast %c1_i32 : i32 to index
    %c0_24 = arith.constant 0 : index
    %c0_25 = arith.constant 0 : index
    %77 = vector.load %arg4[%76, %c0_24, %c0_25] : memref<8x2x32xf32, #tpu.memory_space<vmem>>, vector<1x2x32xf32>
    %78 = vector.shape_cast %77 : vector<1x2x32xf32> to vector<2x32xf32>
    %79 = vector.shape_cast %75 : vector<2x32xf32> to vector<1x2x32xf32>
    tpu.vector_store %arg4[%76, %c0_24, %c0_25], %79 {strides = array<i32>} : memref<8x2x32xf32, #tpu.memory_space<vmem>>, vector<1x2x32xf32>,
    %c2_i32_26 = arith.constant 2 : i32
    %c2_i32_27 = arith.constant 2 : i32
    %80 = arith.muli %c2_i32_26, %c2_i32_27 : i32
    %81 = tpu.assume_multiple %80, 2 : i32
    %82 = arith.index_cast %81 : i32 to index
    %c0_28 = arith.constant 0 : index
    %83 = vector.load %arg7[%82, %c0_28] : memref<16x128xf32, #tpu.memory_space<vmem>>, vector<2x128xf32>
    %cst_29 = arith.constant dense<0.000000e+00> : vector<2x128xf32>
    %84 = tpu.matmul %75, %7, %cst_29 {dimension_numbers = #tpu.dot_dimension_numbers<[1], [0], [0], [1], [0, 0, 1, 1], [], []>} : vector<2x32xf32>, vector<32x128xf32>, vector<2x128xf32> -> vector<2x128xf32>
    %85 = arith.addf %83, %84 : vector<2x128xf32>
    %86 = vector.extract_strided_slice %85 {offsets = [0, 0], sizes = [2, 32], strides = [1, 1]} : vector<2x128xf32> to vector<2x32xf32>
    %87 = arith.negf %86 : vector<2x32xf32>
    %88 = math.exp %87 : vector<2x32xf32>
    %cst_30 = arith.constant 1.000000e+00 : f32
    %89 = vector.broadcast %cst_30 : f32 to vector<2x32xf32>
    %90 = arith.addf %89, %88 : vector<2x32xf32>
    %91 = arith.divf %89, %90 : vector<2x32xf32>
    %92 = vector.extract_strided_slice %85 {offsets = [0, 32], sizes = [2, 32], strides = [1, 1]} : vector<2x128xf32> to vector<2x32xf32>
    %93 = arith.negf %92 : vector<2x32xf32>
    %94 = math.exp %93 : vector<2x32xf32>
    %cst_31 = arith.constant 1.000000e+00 : f32
    %95 = vector.broadcast %cst_31 : f32 to vector<2x32xf32>
    %96 = arith.addf %95, %94 : vector<2x32xf32>
    %97 = arith.divf %95, %96 : vector<2x32xf32>
    %98 = vector.extract_strided_slice %85 {offsets = [0, 64], sizes = [2, 32], strides = [1, 1]} : vector<2x128xf32> to vector<2x32xf32>
    %99 = math.tanh %98 : vector<2x32xf32>
    %100 = vector.extract_strided_slice %85 {offsets = [0, 96], sizes = [2, 32], strides = [1, 1]} : vector<2x128xf32> to vector<2x32xf32>
    %101 = arith.negf %100 : vector<2x32xf32>
    %102 = math.exp %101 : vector<2x32xf32>
    %cst_32 = arith.constant 1.000000e+00 : f32
    %103 = vector.broadcast %cst_32 : f32 to vector<2x32xf32>
    %104 = arith.addf %103, %102 : vector<2x32xf32>
    %105 = arith.divf %103, %104 : vector<2x32xf32>
    %106 = arith.mulf %97, %73 : vector<2x32xf32>
    %107 = arith.mulf %91, %99 : vector<2x32xf32>
    %108 = arith.addf %106, %107 : vector<2x32xf32>
    %109 = math.tanh %108 : vector<2x32xf32>
    %110 = arith.mulf %105, %109 : vector<2x32xf32>
    %111 = arith.index_cast %c2_i32_26 : i32 to index
    %c0_33 = arith.constant 0 : index
    %c0_34 = arith.constant 0 : index
    %112 = vector.load %arg4[%111, %c0_33, %c0_34] : memref<8x2x32xf32, #tpu.memory_space<vmem>>, vector<1x2x32xf32>
    %113 = vector.shape_cast %112 : vector<1x2x32xf32> to vector<2x32xf32>
    %114 = vector.shape_cast %110 : vector<2x32xf32> to vector<1x2x32xf32>
    tpu.vector_store %arg4[%111, %c0_33, %c0_34], %114 {strides = array<i32>} : memref<8x2x32xf32, #tpu.memory_space<vmem>>, vector<1x2x32xf32>,
    %c3_i32 = arith.constant 3 : i32
    %c2_i32_35 = arith.constant 2 : i32
    %115 = arith.muli %c3_i32, %c2_i32_35 : i32
    %116 = tpu.assume_multiple %115, 2 : i32
    %117 = arith.index_cast %116 : i32 to index
    %c0_36 = arith.constant 0 : index
    %118 = vector.load %arg7[%117, %c0_36] : memref<16x128xf32, #tpu.memory_space<vmem>>, vector<2x128xf32>
    %cst_37 = arith.constant dense<0.000000e+00> : vector<2x128xf32>
    %119 = tpu.matmul %110, %7, %cst_37 {dimension_numbers = #tpu.dot_dimension_numbers<[1], [0], [0], [1], [0, 0, 1, 1], [], []>} : vector<2x32xf32>, vector<32x128xf32>, vector<2x128xf32> -> vector<2x128xf32>
    %120 = arith.addf %118, %119 : vector<2x128xf32>
    %121 = vector.extract_strided_slice %120 {offsets = [0, 0], sizes = [2, 32], strides = [1, 1]} : vector<2x128xf32> to vector<2x32xf32>
    %122 = arith.negf %121 : vector<2x32xf32>
    %123 = math.exp %122 : vector<2x32xf32>
    %cst_38 = arith.constant 1.000000e+00 : f32
    %124 = vector.broadcast %cst_38 : f32 to vector<2x32xf32>
    %125 = arith.addf %124, %123 : vector<2x32xf32>
    %126 = arith.divf %124, %125 : vector<2x32xf32>
    %127 = vector.extract_strided_slice %120 {offsets = [0, 32], sizes = [2, 32], strides = [1, 1]} : vector<2x128xf32> to vector<2x32xf32>
    %128 = arith.negf %127 : vector<2x32xf32>
    %129 = math.exp %128 : vector<2x32xf32>
    %cst_39 = arith.constant 1.000000e+00 : f32
    %130 = vector.broadcast %cst_39 : f32 to vector<2x32xf32>
    %131 = arith.addf %130, %129 : vector<2x32xf32>
    %132 = arith.divf %130, %131 : vector<2x32xf32>
    %133 = vector.extract_strided_slice %120 {offsets = [0, 64], sizes = [2, 32], strides = [1, 1]} : vector<2x128xf32> to vector<2x32xf32>
    %134 = math.tanh %133 : vector<2x32xf32>
    %135 = vector.extract_strided_slice %120 {offsets = [0, 96], sizes = [2, 32], strides = [1, 1]} : vector<2x128xf32> to vector<2x32xf32>
    %136 = arith.negf %135 : vector<2x32xf32>
    %137 = math.exp %136 : vector<2x32xf32>
    %cst_40 = arith.constant 1.000000e+00 : f32
    %138 = vector.broadcast %cst_40 : f32 to vector<2x32xf32>
    %139 = arith.addf %138, %137 : vector<2x32xf32>
    %140 = arith.divf %138, %139 : vector<2x32xf32>
    %141 = arith.mulf %132, %108 : vector<2x32xf32>
    %142 = arith.mulf %126, %134 : vector<2x32xf32>
    %143 = arith.addf %141, %142 : vector<2x32xf32>
    %144 = math.tanh %143 : vector<2x32xf32>
    %145 = arith.mulf %140, %144 : vector<2x32xf32>
    %146 = arith.index_cast %c3_i32 : i32 to index
    %c0_41 = arith.constant 0 : index
    %c0_42 = arith.constant 0 : index
    %147 = vector.load %arg4[%146, %c0_41, %c0_42] : memref<8x2x32xf32, #tpu.memory_space<vmem>>, vector<1x2x32xf32>
    %148 = vector.shape_cast %147 : vector<1x2x32xf32> to vector<2x32xf32>
    %149 = vector.shape_cast %145 : vector<2x32xf32> to vector<1x2x32xf32>
    tpu.vector_store %arg4[%146, %c0_41, %c0_42], %149 {strides = array<i32>} : memref<8x2x32xf32, #tpu.memory_space<vmem>>, vector<1x2x32xf32>,
    %c4_i32 = arith.constant 4 : i32
    %c2_i32_43 = arith.constant 2 : i32
    %150 = arith.muli %c4_i32, %c2_i32_43 : i32
    %151 = tpu.assume_multiple %150, 2 : i32
    %152 = arith.index_cast %151 : i32 to index
    %c0_44 = arith.constant 0 : index
    %153 = vector.load %arg7[%152, %c0_44] : memref<16x128xf32, #tpu.memory_space<vmem>>, vector<2x128xf32>
    %cst_45 = arith.constant dense<0.000000e+00> : vector<2x128xf32>
    %154 = tpu.matmul %145, %7, %cst_45 {dimension_numbers = #tpu.dot_dimension_numbers<[1], [0], [0], [1], [0, 0, 1, 1], [], []>} : vector<2x32xf32>, vector<32x128xf32>, vector<2x128xf32> -> vector<2x128xf32>
    %155 = arith.addf %153, %154 : vector<2x128xf32>
    %156 = vector.extract_strided_slice %155 {offsets = [0, 0], sizes = [2, 32], strides = [1, 1]} : vector<2x128xf32> to vector<2x32xf32>
    %157 = arith.negf %156 : vector<2x32xf32>
    %158 = math.exp %157 : vector<2x32xf32>
    %cst_46 = arith.constant 1.000000e+00 : f32
    %159 = vector.broadcast %cst_46 : f32 to vector<2x32xf32>
    %160 = arith.addf %159, %158 : vector<2x32xf32>
    %161 = arith.divf %159, %160 : vector<2x32xf32>
    %162 = vector.extract_strided_slice %155 {offsets = [0, 32], sizes = [2, 32], strides = [1, 1]} : vector<2x128xf32> to vector<2x32xf32>
    %163 = arith.negf %162 : vector<2x32xf32>
    %164 = math.exp %163 : vector<2x32xf32>
    %cst_47 = arith.constant 1.000000e+00 : f32
    %165 = vector.broadcast %cst_47 : f32 to vector<2x32xf32>
    %166 = arith.addf %165, %164 : vector<2x32xf32>
    %167 = arith.divf %165, %166 : vector<2x32xf32>
    %168 = vector.extract_strided_slice %155 {offsets = [0, 64], sizes = [2, 32], strides = [1, 1]} : vector<2x128xf32> to vector<2x32xf32>
    %169 = math.tanh %168 : vector<2x32xf32>
    %170 = vector.extract_strided_slice %155 {offsets = [0, 96], sizes = [2, 32], strides = [1, 1]} : vector<2x128xf32> to vector<2x32xf32>
    %171 = arith.negf %170 : vector<2x32xf32>
    %172 = math.exp %171 : vector<2x32xf32>
    %cst_48 = arith.constant 1.000000e+00 : f32
    %173 = vector.broadcast %cst_48 : f32 to vector<2x32xf32>
    %174 = arith.addf %173, %172 : vector<2x32xf32>
    %175 = arith.divf %173, %174 : vector<2x32xf32>
    %176 = arith.mulf %167, %143 : vector<2x32xf32>
    %177 = arith.mulf %161, %169 : vector<2x32xf32>
    %178 = arith.addf %176, %177 : vector<2x32xf32>
    %179 = math.tanh %178 : vector<2x32xf32>
    %180 = arith.mulf %175, %179 : vector<2x32xf32>
    %181 = arith.index_cast %c4_i32 : i32 to index
    %c0_49 = arith.constant 0 : index
    %c0_50 = arith.constant 0 : index
    %182 = vector.load %arg4[%181, %c0_49, %c0_50] : memref<8x2x32xf32, #tpu.memory_space<vmem>>, vector<1x2x32xf32>
    %183 = vector.shape_cast %182 : vector<1x2x32xf32> to vector<2x32xf32>
    %184 = vector.shape_cast %180 : vector<2x32xf32> to vector<1x2x32xf32>
    tpu.vector_store %arg4[%181, %c0_49, %c0_50], %184 {strides = array<i32>} : memref<8x2x32xf32, #tpu.memory_space<vmem>>, vector<1x2x32xf32>,
    %c5_i32 = arith.constant 5 : i32
    %c2_i32_51 = arith.constant 2 : i32
    %185 = arith.muli %c5_i32, %c2_i32_51 : i32
    %186 = tpu.assume_multiple %185, 2 : i32
    %187 = arith.index_cast %186 : i32 to index
    %c0_52 = arith.constant 0 : index
    %188 = vector.load %arg7[%187, %c0_52] : memref<16x128xf32, #tpu.memory_space<vmem>>, vector<2x128xf32>
    %cst_53 = arith.constant dense<0.000000e+00> : vector<2x128xf32>
    %189 = tpu.matmul %180, %7, %cst_53 {dimension_numbers = #tpu.dot_dimension_numbers<[1], [0], [0], [1], [0, 0, 1, 1], [], []>} : vector<2x32xf32>, vector<32x128xf32>, vector<2x128xf32> -> vector<2x128xf32>
    %190 = arith.addf %188, %189 : vector<2x128xf32>
    %191 = vector.extract_strided_slice %190 {offsets = [0, 0], sizes = [2, 32], strides = [1, 1]} : vector<2x128xf32> to vector<2x32xf32>
    %192 = arith.negf %191 : vector<2x32xf32>
    %193 = math.exp %192 : vector<2x32xf32>
    %cst_54 = arith.constant 1.000000e+00 : f32
    %194 = vector.broadcast %cst_54 : f32 to vector<2x32xf32>
    %195 = arith.addf %194, %193 : vector<2x32xf32>
    %196 = arith.divf %194, %195 : vector<2x32xf32>
    %197 = vector.extract_strided_slice %190 {offsets = [0, 32], sizes = [2, 32], strides = [1, 1]} : vector<2x128xf32> to vector<2x32xf32>
    %198 = arith.negf %197 : vector<2x32xf32>
    %199 = math.exp %198 : vector<2x32xf32>
    %cst_55 = arith.constant 1.000000e+00 : f32
    %200 = vector.broadcast %cst_55 : f32 to vector<2x32xf32>
    %201 = arith.addf %200, %199 : vector<2x32xf32>
    %202 = arith.divf %200, %201 : vector<2x32xf32>
    %203 = vector.extract_strided_slice %190 {offsets = [0, 64], sizes = [2, 32], strides = [1, 1]} : vector<2x128xf32> to vector<2x32xf32>
    %204 = math.tanh %203 : vector<2x32xf32>
    %205 = vector.extract_strided_slice %190 {offsets = [0, 96], sizes = [2, 32], strides = [1, 1]} : vector<2x128xf32> to vector<2x32xf32>
    %206 = arith.negf %205 : vector<2x32xf32>
    %207 = math.exp %206 : vector<2x32xf32>
    %cst_56 = arith.constant 1.000000e+00 : f32
    %208 = vector.broadcast %cst_56 : f32 to vector<2x32xf32>
    %209 = arith.addf %208, %207 : vector<2x32xf32>
    %210 = arith.divf %208, %209 : vector<2x32xf32>
    %211 = arith.mulf %202, %178 : vector<2x32xf32>
    %212 = arith.mulf %196, %204 : vector<2x32xf32>
    %213 = arith.addf %211, %212 : vector<2x32xf32>
    %214 = math.tanh %213 : vector<2x32xf32>
    %215 = arith.mulf %210, %214 : vector<2x32xf32>
    %216 = arith.index_cast %c5_i32 : i32 to index
    %c0_57 = arith.constant 0 : index
    %c0_58 = arith.constant 0 : index
    %217 = vector.load %arg4[%216, %c0_57, %c0_58] : memref<8x2x32xf32, #tpu.memory_space<vmem>>, vector<1x2x32xf32>
    %218 = vector.shape_cast %217 : vector<1x2x32xf32> to vector<2x32xf32>
    %219 = vector.shape_cast %215 : vector<2x32xf32> to vector<1x2x32xf32>
    tpu.vector_store %arg4[%216, %c0_57, %c0_58], %219 {strides = array<i32>} : memref<8x2x32xf32, #tpu.memory_space<vmem>>, vector<1x2x32xf32>,
    %c6_i32 = arith.constant 6 : i32
    %c2_i32_59 = arith.constant 2 : i32
    %220 = arith.muli %c6_i32, %c2_i32_59 : i32
    %221 = tpu.assume_multiple %220, 2 : i32
    %222 = arith.index_cast %221 : i32 to index
    %c0_60 = arith.constant 0 : index
    %223 = vector.load %arg7[%222, %c0_60] : memref<16x128xf32, #tpu.memory_space<vmem>>, vector<2x128xf32>
    %cst_61 = arith.constant dense<0.000000e+00> : vector<2x128xf32>
    %224 = tpu.matmul %215, %7, %cst_61 {dimension_numbers = #tpu.dot_dimension_numbers<[1], [0], [0], [1], [0, 0, 1, 1], [], []>} : vector<2x32xf32>, vector<32x128xf32>, vector<2x128xf32> -> vector<2x128xf32>
    %225 = arith.addf %223, %224 : vector<2x128xf32>
    %226 = vector.extract_strided_slice %225 {offsets = [0, 0], sizes = [2, 32], strides = [1, 1]} : vector<2x128xf32> to vector<2x32xf32>
    %227 = arith.negf %226 : vector<2x32xf32>
    %228 = math.exp %227 : vector<2x32xf32>
    %cst_62 = arith.constant 1.000000e+00 : f32
    %229 = vector.broadcast %cst_62 : f32 to vector<2x32xf32>
    %230 = arith.addf %229, %228 : vector<2x32xf32>
    %231 = arith.divf %229, %230 : vector<2x32xf32>
    %232 = vector.extract_strided_slice %225 {offsets = [0, 32], sizes = [2, 32], strides = [1, 1]} : vector<2x128xf32> to vector<2x32xf32>
    %233 = arith.negf %232 : vector<2x32xf32>
    %234 = math.exp %233 : vector<2x32xf32>
    %cst_63 = arith.constant 1.000000e+00 : f32
    %235 = vector.broadcast %cst_63 : f32 to vector<2x32xf32>
    %236 = arith.addf %235, %234 : vector<2x32xf32>
    %237 = arith.divf %235, %236 : vector<2x32xf32>
    %238 = vector.extract_strided_slice %225 {offsets = [0, 64], sizes = [2, 32], strides = [1, 1]} : vector<2x128xf32> to vector<2x32xf32>
    %239 = math.tanh %238 : vector<2x32xf32>
    %240 = vector.extract_strided_slice %225 {offsets = [0, 96], sizes = [2, 32], strides = [1, 1]} : vector<2x128xf32> to vector<2x32xf32>
    %241 = arith.negf %240 : vector<2x32xf32>
    %242 = math.exp %241 : vector<2x32xf32>
    %cst_64 = arith.constant 1.000000e+00 : f32
    %243 = vector.broadcast %cst_64 : f32 to vector<2x32xf32>
    %244 = arith.addf %243, %242 : vector<2x32xf32>
    %245 = arith.divf %243, %244 : vector<2x32xf32>
    %246 = arith.mulf %237, %213 : vector<2x32xf32>
    %247 = arith.mulf %231, %239 : vector<2x32xf32>
    %248 = arith.addf %246, %247 : vector<2x32xf32>
    %249 = math.tanh %248 : vector<2x32xf32>
    %250 = arith.mulf %245, %249 : vector<2x32xf32>
    %251 = arith.index_cast %c6_i32 : i32 to index
    %c0_65 = arith.constant 0 : index
    %c0_66 = arith.constant 0 : index
    %252 = vector.load %arg4[%251, %c0_65, %c0_66] : memref<8x2x32xf32, #tpu.memory_space<vmem>>, vector<1x2x32xf32>
    %253 = vector.shape_cast %252 : vector<1x2x32xf32> to vector<2x32xf32>
    %254 = vector.shape_cast %250 : vector<2x32xf32> to vector<1x2x32xf32>
    tpu.vector_store %arg4[%251, %c0_65, %c0_66], %254 {strides = array<i32>} : memref<8x2x32xf32, #tpu.memory_space<vmem>>, vector<1x2x32xf32>,
    %c7_i32 = arith.constant 7 : i32
    %c2_i32_67 = arith.constant 2 : i32
    %255 = arith.muli %c7_i32, %c2_i32_67 : i32
    %256 = tpu.assume_multiple %255, 2 : i32
    %257 = arith.index_cast %256 : i32 to index
    %c0_68 = arith.constant 0 : index
    %258 = vector.load %arg7[%257, %c0_68] : memref<16x128xf32, #tpu.memory_space<vmem>>, vector<2x128xf32>
    %cst_69 = arith.constant dense<0.000000e+00> : vector<2x128xf32>
    %259 = tpu.matmul %250, %7, %cst_69 {dimension_numbers = #tpu.dot_dimension_numbers<[1], [0], [0], [1], [0, 0, 1, 1], [], []>} : vector<2x32xf32>, vector<32x128xf32>, vector<2x128xf32> -> vector<2x128xf32>
    %260 = arith.addf %258, %259 : vector<2x128xf32>
    %261 = vector.extract_strided_slice %260 {offsets = [0, 0], sizes = [2, 32], strides = [1, 1]} : vector<2x128xf32> to vector<2x32xf32>
    %262 = arith.negf %261 : vector<2x32xf32>
    %263 = math.exp %262 : vector<2x32xf32>
    %cst_70 = arith.constant 1.000000e+00 : f32
    %264 = vector.broadcast %cst_70 : f32 to vector<2x32xf32>
    %265 = arith.addf %264, %263 : vector<2x32xf32>
    %266 = arith.divf %264, %265 : vector<2x32xf32>
    %267 = vector.extract_strided_slice %260 {offsets = [0, 32], sizes = [2, 32], strides = [1, 1]} : vector<2x128xf32> to vector<2x32xf32>
    %268 = arith.negf %267 : vector<2x32xf32>
    %269 = math.exp %268 : vector<2x32xf32>
    %cst_71 = arith.constant 1.000000e+00 : f32
    %270 = vector.broadcast %cst_71 : f32 to vector<2x32xf32>
    %271 = arith.addf %270, %269 : vector<2x32xf32>
    %272 = arith.divf %270, %271 : vector<2x32xf32>
    %273 = vector.extract_strided_slice %260 {offsets = [0, 64], sizes = [2, 32], strides = [1, 1]} : vector<2x128xf32> to vector<2x32xf32>
    %274 = math.tanh %273 : vector<2x32xf32>
    %275 = vector.extract_strided_slice %260 {offsets = [0, 96], sizes = [2, 32], strides = [1, 1]} : vector<2x128xf32> to vector<2x32xf32>
    %276 = arith.negf %275 : vector<2x32xf32>
    %277 = math.exp %276 : vector<2x32xf32>
    %cst_72 = arith.constant 1.000000e+00 : f32
    %278 = vector.broadcast %cst_72 : f32 to vector<2x32xf32>
    %279 = arith.addf %278, %277 : vector<2x32xf32>
    %280 = arith.divf %278, %279 : vector<2x32xf32>
    %281 = arith.mulf %272, %248 : vector<2x32xf32>
    %282 = arith.mulf %266, %274 : vector<2x32xf32>
    %283 = arith.addf %281, %282 : vector<2x32xf32>
    %284 = math.tanh %283 : vector<2x32xf32>
    %285 = arith.mulf %280, %284 : vector<2x32xf32>
    %286 = arith.index_cast %c7_i32 : i32 to index
    %c0_73 = arith.constant 0 : index
    %c0_74 = arith.constant 0 : index
    %287 = vector.load %arg4[%286, %c0_73, %c0_74] : memref<8x2x32xf32, #tpu.memory_space<vmem>>, vector<1x2x32xf32>
    %288 = vector.shape_cast %287 : vector<1x2x32xf32> to vector<2x32xf32>
    %289 = vector.shape_cast %285 : vector<2x32xf32> to vector<1x2x32xf32>
    tpu.vector_store %arg4[%286, %c0_73, %c0_74], %289 {strides = array<i32>} : memref<8x2x32xf32, #tpu.memory_space<vmem>>, vector<1x2x32xf32>,
    %c8_i32 = arith.constant 8 : i32
    %c0_75 = arith.constant 0 : index
    %c0_76 = arith.constant 0 : index
    %290 = vector.load %arg5[%c0_75, %c0_76] : memref<2x32xf32, #tpu.memory_space<vmem>>, vector<2x32xf32>
    tpu.vector_store %arg5[%c0_75, %c0_76], %285 {strides = array<i32>} : memref<2x32xf32, #tpu.memory_space<vmem>>, vector<2x32xf32>,
    %c0_77 = arith.constant 0 : index
    %c0_78 = arith.constant 0 : index
    %291 = vector.load %arg6[%c0_77, %c0_78] : memref<2x32xf32, #tpu.memory_space<vmem>>, vector<2x32xf32>
    tpu.vector_store %arg6[%c0_77, %c0_78], %283 {strides = array<i32>} : memref<2x32xf32, #tpu.memory_space<vmem>>, vector<2x32xf32>,
    return
  }
}

</mosaic_0001>

<llo_original>
// kernel: tpu_custom_call.1
$region0: #{tpu_custom_call.1}
  #allocation0 [shape = 'u32[]', space=smem, size = 0x4, offset = 0x4, fixed_abs, tag = 'smem constant byte address 0x4 - core index']
  #allocation1 [shape = 'u32[144,128]{1,0:T(1,128)}', space=vmem, size = 0x12000, scoped, tag = 'internal scratch']
  #allocation2 [shape = 'f32[16,128]{1,0:T(8,128)}', space=vmem, size = 0x2000, scoped, tag = 'scratch operand']
  %s0 = inlined_call_operand.hbm [shape: f32[16,16], index: 0, kind: input, shape index: {}]
  %s1 = inlined_call_operand.hbm [shape: f32[16,128], index: 1, kind: input, shape index: {}]
  %s2 = inlined_call_operand.hbm [shape: f32[32,128], index: 2, kind: input, shape index: {}]
  %s3 = inlined_call_operand.vmem [shape: f32[1,128], index: 3, kind: input, shape index: {}]
  %s4 = inlined_call_operand.hbm [shape: f32[8,2,32], index: 4, kind: output, shape index: {0}]
  %s5 = inlined_call_operand.hbm [shape: f32[2,32], index: 5, kind: output, shape index: {1}]
  %s6 = inlined_call_operand.hbm [shape: f32[2,32], index: 6, kind: output, shape index: {2}]
  %7 = xla_tuple %s4, %s5, %s6
  %s8 = sld [smem:[#allocation0]]
  $region54: #{tpu_custom_call.1} parent=0
    _
  %s10 = ssub.s32 1, %s8
  %s11 = scalar_select 0, %s10, %s8
  $region1: #{tpu_custom_call.1} parent=0
    #allocation3 [shape = 'u8[8192]{0}', space=vmem, size = 0x2000, scoped, tag = 'input window, operand 0, single buffered']
    #allocation4 [shape = 's32[1]{0}', space=sflag, size = 0x4, scoped, tag = 'scoped memory for tpu_custom_call.1']
    #allocation5 [shape = 's32[1]{0}', space=sflag, size = 0x4, scoped, tag = 'scoped memory for tpu_custom_call.1']
    #allocation6 [shape = 'u8[8192]{0}', space=vmem, size = 0x2000, scoped, tag = 'input window, operand 1, single buffered']
    #allocation7 [shape = 's32[1]{0}', space=sflag, size = 0x4, scoped, tag = 'scoped memory for tpu_custom_call.1']
    #allocation8 [shape = 'u8[16384]{0}', space=vmem, size = 0x4000, scoped, tag = 'input window, operand 2, single buffered']
    #allocation9 [shape = 'u8[8192]{0}', space=vmem, size = 0x2000, scoped, tag = 'output window, operand 0, single buffered']
    #allocation10 [shape = 'u8[1024]{0}', space=vmem, size = 0x400, scoped, tag = 'output window, operand 1, single buffered']
    #allocation11 [shape = 's32[1]{0}', space=sflag, size = 0x4, scoped, tag = 'scoped memory for tpu_custom_call.1']
    #allocation12 [shape = 'u8[1024]{0}', space=vmem, size = 0x400, scoped, tag = 'output window, operand 2, single buffered']
    %12 = vsyncpa [#allocation4], 0
    %13 = vsyncpa [#allocation7], 0
    %14 = vsyncpa [#allocation5], 0
    %15 = vsyncpa [#allocation11], 0
    // Predicated region
    $region2: #{tpu_custom_call.1} parent=1 // pred_check
      _
    $region3: #{tpu_custom_call.1} parent=1 // pred_check_branch
      %17 = sbr.rel (0) target = $region5
    $region4: #{tpu_custom_call.1} parent=1 // pred_region
      %s19 = ssub.s32 256, 256
      %20 = vsyncadd [#allocation4], %s19
      %s21 = sshll.u32 [#allocation3], 4
      %s22 = int_to_ptr.vmem [resolvable:$true] %s21
      %27 = dma.hbm_to_vmem [thread:$0]  %s0, 256, %s22, [#allocation4], 128, 128, 8
    $region5: #{tpu_custom_call.1} parent=1 // pred_fallthru
      _
    // Predicated region
    $region6: #{tpu_custom_call.1} parent=1 // pred_check
      _
    $region7: #{tpu_custom_call.1} parent=1 // pred_check_branch
      %29 = sbr.rel (0) target = $region9
    $region8: #{tpu_custom_call.1} parent=1 // pred_region
      %s31 = ssub.s32 256, 256
      %32 = vsyncadd [#allocation7], %s31
      %s33 = sshll.u32 [#allocation6], 4
      %s34 = int_to_ptr.vmem [resolvable:$true] %s33
      %39 = dma.hbm_to_vmem [thread:$0]  %s1, 256, %s34, [#allocation7], 128, 128, 8
    $region9: #{tpu_custom_call.1} parent=1 // pred_fallthru
      _
    // Predicated region
    $region10: #{tpu_custom_call.1} parent=1 // pred_check
      _
    $region11: #{tpu_custom_call.1} parent=1 // pred_check_branch
      %41 = sbr.rel (0) target = $region13
    $region12: #{tpu_custom_call.1} parent=1 // pred_region
      %s43 = ssub.s32 512, 512
      %44 = vsyncadd [#allocation7], %s43
      %s45 = sshll.u32 [#allocation8], 4
      %s46 = int_to_ptr.vmem [resolvable:$true] %s45
      %51 = dma.hbm_to_vmem [thread:$0]  %s2, 512, %s46, [#allocation7], 128, 128, 8
    $region13: #{tpu_custom_call.1} parent=1 // pred_fallthru
      _
    // Predicated region
    $region14: #{tpu_custom_call.1} parent=1 // pred_check
      _
    $region15: #{tpu_custom_call.1} parent=1 // pred_check_branch
      %53 = sbr.rel (0) target = $region17
    $region16: #{tpu_custom_call.1} parent=1 // pred_region
      _
    $region17: #{tpu_custom_call.1} parent=1 // pred_fallthru
      _
    // Predicated region
    $region18: #{tpu_custom_call.1} parent=1 // pred_check
      _
    $region19: #{tpu_custom_call.1} parent=1 // pred_check_branch
      %55 = sbr.rel (0) target = $region21
    $region20: #{tpu_custom_call.1} parent=1 // pred_region
      %56 = dma.done [#allocation4], 256
    $region21: #{tpu_custom_call.1} parent=1 // pred_fallthru
      _
    // Predicated region
    $region22: #{tpu_custom_call.1} parent=1 // pred_check
      _
    $region23: #{tpu_custom_call.1} parent=1 // pred_check_branch
      %58 = sbr.rel (0) target = $region25
    $region24: #{tpu_custom_call.1} parent=1 // pred_region
      %59 = dma.done [#allocation7], 256
    $region25: #{tpu_custom_call.1} parent=1 // pred_fallthru
      _
    // Predicated region
    $region26: #{tpu_custom_call.1} parent=1 // pred_check
      _
    $region27: #{tpu_custom_call.1} parent=1 // pred_check_branch
      %61 = sbr.rel (0) target = $region29
    $region28: #{tpu_custom_call.1} parent=1 // pred_region
      %62 = dma.done [#allocation7], 512
    $region29: #{tpu_custom_call.1} parent=1 // pred_fallthru
      _
    %v63 = vld [vmem:[#allocation3] sm:$0xff]
    %v64 = vld [vmem:[#allocation3 + $0x8] sm:$0xff]
    %v65 = vld [vmem:[#allocation6] sm:$0xff]
    %v66 = vld [vmem:[#allocation6 + $0x8] sm:$0xff]
    %v67 = vld [vmem:[%s3] sm:$0x1]
    %v69 = vlaneseq
    %v70 = vshrl.u32 %v69, 7
    %v71 = vsub.s32 0, %v70
    %v72 = vrot.slane %v67, %v71
    %vm74 = vcmask 130048
    %v76 = vsel %vm74, %v63, 0
    %v79 = vsel %vm74, %v64, 0
    %81 = vmatprep.subr.mxu0 0.0
    %82 = vmatpush1.msra.mxu0 %v65
    %83 = vmatprep.subr.mxu0 0.0
    %84 = vmatpush1.msra.mxu0 %v66
    %85 = vmatprep.subr.mxu0 0.0
    %86 = vmatpush1.msra.mxu0 0.0
    %87 = vmatprep.subr.mxu0 0.0
    %88 = vmatpush1.msra.mxu0 0.0
    %89 = vmatprep.subr.mxu0 0.0
    %90 = vmatpush1.msra.mxu0 0.0
    %91 = vmatprep.subr.mxu0 0.0
    %92 = vmatpush1.msra.mxu0 0.0
    %93 = vmatprep.subr.mxu0 0.0
    %94 = vmatpush1.msra.mxu0 0.0
    %95 = vmatprep.subr.mxu0 0.0
    %96 = vmatpush1.msra.mxu0 0.0
    %97 = vmatprep.subr.mxu0 0.0
    %98 = vmatpush1.msra.mxu0 0.0
    %99 = vmatprep.subr.mxu0 0.0
    %100 = vmatpush1.msra.mxu0 0.0
    %101 = vmatprep.subr.mxu0 0.0
    %102 = vmatpush1.msra.mxu0 0.0
    %103 = vmatprep.subr.mxu0 0.0
    %104 = vmatpush1.msra.mxu0 0.0
    %105 = vmatprep.subr.mxu0 0.0
    %106 = vmatpush1.msra.mxu0 0.0
    %107 = vmatprep.subr.mxu0 0.0
    %108 = vmatpush1.msra.mxu0 0.0
    %109 = vmatprep.subr.mxu0 0.0
    %110 = vmatpush1.msra.mxu0 0.0
    %111 = vmatprep.subr.mxu0 0.0
    %112 = vmatpush1.msra.mxu0 0.0
    %113 = vmatprep.subr.mxu0 0.0
    %114 = vmatpush1.msra.mxu0 0.0
    %115 = vmatprep.subr.mxu0 0.0
    %116 = vmatpush1.msra.mxu0 0.0
    %117 = vmatprep.subr.mxu0 0.0
    %118 = vmatpush1.msra.mxu0 0.0
    %119 = vmatprep.subr.mxu0 0.0
    %120 = vmatpush1.msra.mxu0 0.0
    %121 = vmatprep.subr.mxu0 0.0
    %122 = vmatpush1.msra.mxu0 0.0
    %123 = vmatprep.subr.mxu0 0.0
    %124 = vmatpush1.msra.mxu0 0.0
    %125 = vmatprep.subr.mxu0 0.0
    %126 = vmatpush1.msra.mxu0 0.0
    %127 = vmatprep.subr.mxu0 0.0
    %128 = vmatpush1.msra.mxu0 0.0
    %129 = vmatprep.subr.mxu0 0.0
    %130 = vmatpush1.msra.mxu0 0.0
    %131 = vmatprep.subr.mxu0 0.0
    %132 = vmatpush1.msra.mxu0 0.0
    %133 = vmatprep.subr.mxu0 0.0
    %134 = vmatpush1.msra.mxu0 0.0
    %135 = vmatprep.subr.mxu0 0.0
    %136 = vmatpush1.msra.mxu0 0.0
    %137 = vmatprep.subr.mxu0 0.0
    %138 = vmatpush1.msra.mxu0 0.0
    %139 = vmatprep.subr.mxu0 0.0
    %140 = vmatpush1.msra.mxu0 0.0
    %141 = vmatprep.subr.mxu0 0.0
    %142 = vmatpush1.msra.mxu0 0.0
    %143 = vmatprep.subr.mxu0 0.0
    %144 = vmatpush1.msra.mxu0 0.0
    %145 = vmatprep.mubr.f32.mxu0 0.0
    %146 = vmatmul.mubr.f32.gmra.mrb[0].mxu0 %v76
    %v147 = vpop.f32.mrb[0].mxu0
    %v148 = vadd.f32 %v72, %v147
    %v149 = vpop.f32.mrb[0].mxu0
    %150 = vmatprep.mubr.f32.mxu0 0.0
    %151 = vmatmul.mubr.f32.gmra.mrb[0].mxu0 %v79
    %v152 = vpop.f32.mrb[0].mxu0
    %v153 = vadd.f32 %v72, %v152
    %v154 = vpop.f32.mrb[0].mxu0
    %155 = vdwg.mxu0
    %156 = vst [vmem:[#allocation2] sm:$0xff] %v148
    %157 = vst [vmem:[#allocation2 + $0x8] sm:$0xff] %v153
    %v158 = vld [vmem:[#allocation8] sm:$0xff]
    %v159 = vld [vmem:[#allocation8 + $0x8] sm:$0xff]
    %v160 = vld [vmem:[#allocation8 + $0x10] sm:$0xff]
    %v161 = vld [vmem:[#allocation8 + $0x18] sm:$0xff]
    %v162 = vld [vmem:[#allocation2] sm:$0x3]
    %vm163 = vcmask 261120
    %v165 = vsel %vm163, 0.0, 0
    %167 = vmatprep.subr.mxu0 0.0
    %168 = vmatpush1.msra.mxu0 %v158
    %169 = vmatprep.subr.mxu0 0.0
    %170 = vmatpush1.msra.mxu0 %v159
    %171 = vmatprep.subr.mxu0 0.0
    %172 = vmatpush1.msra.mxu0 %v160
    %173 = vmatprep.subr.mxu0 0.0
    %174 = vmatpush1.msra.mxu0 %v161
    %175 = vmatprep.subr.mxu0 0.0
    %176 = vmatpush1.msra.mxu0 0.0
    %177 = vmatprep.subr.mxu0 0.0
    %178 = vmatpush1.msra.mxu0 0.0
    %179 = vmatprep.subr.mxu0 0.0
    %180 = vmatpush1.msra.mxu0 0.0
    %181 = vmatprep.subr.mxu0 0.0
    %182 = vmatpush1.msra.mxu0 0.0
    %183 = vmatprep.subr.mxu0 0.0
    %184 = vmatpush1.msra.mxu0 0.0
    %185 = vmatprep.subr.mxu0 0.0
    %186 = vmatpush1.msra.mxu0 0.0
    %187 = vmatprep.subr.mxu0 0.0
    %188 = vmatpush1.msra.mxu0 0.0
    %189 = vmatprep.subr.mxu0 0.0
    %190 = vmatpush1.msra.mxu0 0.0
    %191 = vmatprep.subr.mxu0 0.0
    %192 = vmatpush1.msra.mxu0 0.0
    %193 = vmatprep.subr.mxu0 0.0
    %194 = vmatpush1.msra.mxu0 0.0
    %195 = vmatprep.subr.mxu0 0.0
    %196 = vmatpush1.msra.mxu0 0.0
    %197 = vmatprep.subr.mxu0 0.0
    %198 = vmatpush1.msra.mxu0 0.0
    %199 = vmatprep.subr.mxu0 0.0
    %200 = vmatpush1.msra.mxu0 0.0
    %201 = vmatprep.subr.mxu0 0.0
    %202 = vmatpush1.msra.mxu0 0.0
    %203 = vmatprep.subr.mxu0 0.0
    %204 = vmatpush1.msra.mxu0 0.0
    %205 = vmatprep.subr.mxu0 0.0
    %206 = vmatpush1.msra.mxu0 0.0
    %207 = vmatprep.subr.mxu0 0.0
    %208 = vmatpush1.msra.mxu0 0.0
    %209 = vmatprep.subr.mxu0 0.0
    %210 = vmatpush1.msra.mxu0 0.0
    %211 = vmatprep.subr.mxu0 0.0
    %212 = vmatpush1.msra.mxu0 0.0
    %213 = vmatprep.subr.mxu0 0.0
    %214 = vmatpush1.msra.mxu0 0.0
    %215 = vmatprep.subr.mxu0 0.0
    %216 = vmatpush1.msra.mxu0 0.0
    %217 = vmatprep.subr.mxu0 0.0
    %218 = vmatpush1.msra.mxu0 0.0
    %219 = vmatprep.subr.mxu0 0.0
    %220 = vmatpush1.msra.mxu0 0.0
    %221 = vmatprep.subr.mxu0 0.0
    %222 = vmatpush1.msra.mxu0 0.0
    %223 = vmatprep.subr.mxu0 0.0
    %224 = vmatpush1.msra.mxu0 0.0
    %225 = vmatprep.subr.mxu0 0.0
    %226 = vmatpush1.msra.mxu0 0.0
    %227 = vmatprep.subr.mxu0 0.0
    %228 = vmatpush1.msra.mxu0 0.0
    %229 = vmatprep.subr.mxu0 0.0
    %230 = vmatpush1.msra.mxu0 0.0
    %231 = vmatprep.mubr.f32.mxu0 0.0
    %232 = vmatmul.mubr.f32.gmra.mrb[0].mxu0 %v165
    %v233 = vpop.f32.mrb[0].mxu0
    %v234 = vadd.f32 0.0, %v233
    %v235 = vpop.f32.mrb[0].mxu0
    %236 = vdwg.mxu0
    %v237 = vadd.f32 %v162, %v234
    %v238 = vxor.u32 %v237, 2147483648
    %v239 = vmul.f32 %v238, 1.442695
    %v240 = vpow.pop %v239
    %v241 = vadd.f32 %v240, 1.0
    %v242 = vrcp.pop %v241
    %v243 = vmul.f32 1.0, %v242
    %v244 = vtanh.pop %v237
    %v245 = vmul.f32 %v243, 0.0
    %247 = vrot.lane.b32.xlu0 %v244, 64
    %v248 = vpop.permute.xlu0 %247
    %v250 = vmul.f32 %v243, %v248
    %252 = vrot.lane.b32.xlu0 %v250, 32
    %v253 = vpop.permute.xlu0 %252
    %v255 = vadd.f32 %v245, %v253
    %v256 = vtanh.pop %v255
    %258 = vrot.lane.b32.xlu0 %v256, 64
    %v259 = vpop.permute.xlu0 %258
    %v261 = vmul.f32 %v243, %v259
    %263 = vrot.lane.b32.xlu0 %v261, 32
    %v264 = vpop.permute.xlu0 %263
    %vm266 = vcmask 254976
    %267 = vst.msk [vmem:[#allocation9] sm:$0x3] %vm266, %v264
    %s268 = scalar_lea.vmem [#allocation2], 2
    %v269 = vld [vmem:[%s268] sm:$0x3]
    %v270 = vsel %vm163, %v264, 0
    %272 = vmatprep.subr.mxu0 0.0
    %273 = vmatpush1.msra.mxu0 %v158
    %274 = vmatprep.subr.mxu0 0.0
    %275 = vmatpush1.msra.mxu0 %v159
    %276 = vmatprep.subr.mxu0 0.0
    %277 = vmatpush1.msra.mxu0 %v160
    %278 = vmatprep.subr.mxu0 0.0
    %279 = vmatpush1.msra.mxu0 %v161
    %280 = vmatprep.subr.mxu0 0.0
    %281 = vmatpush1.msra.mxu0 0.0
    %282 = vmatprep.subr.mxu0 0.0
    %283 = vmatpush1.msra.mxu0 0.0
    %284 = vmatprep.subr.mxu0 0.0
    %285 = vmatpush1.msra.mxu0 0.0
    %286 = vmatprep.subr.mxu0 0.0
    %287 = vmatpush1.msra.mxu0 0.0
    %288 = vmatprep.subr.mxu0 0.0
    %289 = vmatpush1.msra.mxu0 0.0
    %290 = vmatprep.subr.mxu0 0.0
    %291 = vmatpush1.msra.mxu0 0.0
    %292 = vmatprep.subr.mxu0 0.0
    %293 = vmatpush1.msra.mxu0 0.0
    %294 = vmatprep.subr.mxu0 0.0
    %295 = vmatpush1.msra.mxu0 0.0
    %296 = vmatprep.subr.mxu0 0.0
    %297 = vmatpush1.msra.mxu0 0.0
    %298 = vmatprep.subr.mxu0 0.0
    %299 = vmatpush1.msra.mxu0 0.0
    %300 = vmatprep.subr.mxu0 0.0
    %301 = vmatpush1.msra.mxu0 0.0
    %302 = vmatprep.subr.mxu0 0.0
    %303 = vmatpush1.msra.mxu0 0.0
    %304 = vmatprep.subr.mxu0 0.0
    %305 = vmatpush1.msra.mxu0 0.0
    %306 = vmatprep.subr.mxu0 0.0
    %307 = vmatpush1.msra.mxu0 0.0
    %308 = vmatprep.subr.mxu0 0.0
    %309 = vmatpush1.msra.mxu0 0.0
    %310 = vmatprep.subr.mxu0 0.0
    %311 = vmatpush1.msra.mxu0 0.0
    %312 = vmatprep.subr.mxu0 0.0
    %313 = vmatpush1.msra.mxu0 0.0
    %314 = vmatprep.subr.mxu0 0.0
    %315 = vmatpush1.msra.mxu0 0.0
    %316 = vmatprep.subr.mxu0 0.0
    %317 = vmatpush1.msra.mxu0 0.0
    %318 = vmatprep.subr.mxu0 0.0
    %319 = vmatpush1.msra.mxu0 0.0
    %320 = vmatprep.subr.mxu0 0.0
    %321 = vmatpush1.msra.mxu0 0.0
    %322 = vmatprep.subr.mxu0 0.0
    %323 = vmatpush1.msra.mxu0 0.0
    %324 = vmatprep.subr.mxu0 0.0
    %325 = vmatpush1.msra.mxu0 0.0
    %326 = vmatprep.subr.mxu0 0.0
    %327 = vmatpush1.msra.mxu0 0.0
    %328 = vmatprep.subr.mxu0 0.0
    %329 = vmatpush1.msra.mxu0 0.0
    %330 = vmatprep.subr.mxu0 0.0
    %331 = vmatpush1.msra.mxu0 0.0
    %332 = vmatprep.subr.mxu0 0.0
    %333 = vmatpush1.msra.mxu0 0.0
    %334 = vmatprep.subr.mxu0 0.0
    %335 = vmatpush1.msra.mxu0 0.0
    %336 = vmatprep.mubr.f32.mxu0 0.0
    %337 = vmatmul.mubr.f32.gmra.mrb[0].mxu0 %v270
    %v338 = vpop.f32.mrb[0].mxu0
    %v339 = vadd.f32 0.0, %v338
    %v340 = vpop.f32.mrb[0].mxu0
    %341 = vdwg.mxu0
    %v342 = vadd.f32 %v269, %v339
    %v343 = vxor.u32 %v342, 2147483648
    %v344 = vmul.f32 %v343, 1.442695
    %v345 = vpow.pop %v344
    %v346 = vadd.f32 %v345, 1.0
    %v347 = vrcp.pop %v346
    %v348 = vmul.f32 1.0, %v347
    %v349 = vtanh.pop %v342
    %v350 = vmul.f32 %v348, %v255
    %352 = vrot.lane.b32.xlu0 %v349, 64
    %v353 = vpop.permute.xlu0 %352
    %v355 = vmul.f32 %v348, %v353
    %357 = vrot.lane.b32.xlu0 %v355, 32
    %v358 = vpop.permute.xlu0 %357
    %v360 = vadd.f32 %v350, %v358
    %v361 = vtanh.pop %v360
    %363 = vrot.lane.b32.xlu0 %v361, 64
    %v364 = vpop.permute.xlu0 %363
    %v366 = vmul.f32 %v348, %v364
    %368 = vrot.lane.b32.xlu0 %v366, 32
    %v369 = vpop.permute.xlu0 %368
    %s371 = scalar_lea.vmem [#allocation9], 2
    %372 = vst.msk [vmem:[%s371] sm:$0x3] %vm266, %v369
    %s373 = scalar_lea.vmem [#allocation2], 4
    %v374 = vld [vmem:[%s373] sm:$0x3]
    %v375 = vsel %vm163, %v369, 0
    %377 = vmatprep.subr.mxu0 0.0
    %378 = vmatpush1.msra.mxu0 %v158
    %379 = vmatprep.subr.mxu0 0.0
    %380 = vmatpush1.msra.mxu0 %v159
    %381 = vmatprep.subr.mxu0 0.0
    %382 = vmatpush1.msra.mxu0 %v160
    %383 = vmatprep.subr.mxu0 0.0
    %384 = vmatpush1.msra.mxu0 %v161
    %385 = vmatprep.subr.mxu0 0.0
    %386 = vmatpush1.msra.mxu0 0.0
    %387 = vmatprep.subr.mxu0 0.0
    %388 = vmatpush1.msra.mxu0 0.0
    %389 = vmatprep.subr.mxu0 0.0
    %390 = vmatpush1.msra.mxu0 0.0
    %391 = vmatprep.subr.mxu0 0.0
    %392 = vmatpush1.msra.mxu0 0.0
    %393 = vmatprep.subr.mxu0 0.0
    %394 = vmatpush1.msra.mxu0 0.0
    %395 = vmatprep.subr.mxu0 0.0
    %396 = vmatpush1.msra.mxu0 0.0
    %397 = vmatprep.subr.mxu0 0.0
    %398 = vmatpush1.msra.mxu0 0.0
    %399 = vmatprep.subr.mxu0 0.0
    %400 = vmatpush1.msra.mxu0 0.0
    %401 = vmatprep.subr.mxu0 0.0
    %402 = vmatpush1.msra.mxu0 0.0
    %403 = vmatprep.subr.mxu0 0.0
    %404 = vmatpush1.msra.mxu0 0.0
    %405 = vmatprep.subr.mxu0 0.0
    %406 = vmatpush1.msra.mxu0 0.0
    %407 = vmatprep.subr.mxu0 0.0
    %408 = vmatpush1.msra.mxu0 0.0
    %409 = vmatprep.subr.mxu0 0.0
    %410 = vmatpush1.msra.mxu0 0.0
    %411 = vmatprep.subr.mxu0 0.0
    %412 = vmatpush1.msra.mxu0 0.0
    %413 = vmatprep.subr.mxu0 0.0
    %414 = vmatpush1.msra.mxu0 0.0
    %415 = vmatprep.subr.mxu0 0.0
    %416 = vmatpush1.msra.mxu0 0.0
    %417 = vmatprep.subr.mxu0 0.0
    %418 = vmatpush1.msra.mxu0 0.0
    %419 = vmatprep.subr.mxu0 0.0
    %420 = vmatpush1.msra.mxu0 0.0
    %421 = vmatprep.subr.mxu0 0.0
    %422 = vmatpush1.msra.mxu0 0.0
    %423 = vmatprep.subr.mxu0 0.0
    %424 = vmatpush1.msra.mxu0 0.0
    %425 = vmatprep.subr.mxu0 0.0
    %426 = vmatpush1.msra.mxu0 0.0
    %427 = vmatprep.subr.mxu0 0.0
    %428 = vmatpush1.msra.mxu0 0.0
    %429 = vmatprep.subr.mxu0 0.0
    %430 = vmatpush1.msra.mxu0 0.0
    %431 = vmatprep.subr.mxu0 0.0
    %432 = vmatpush1.msra.mxu0 0.0
    %433 = vmatprep.subr.mxu0 0.0
    %434 = vmatpush1.msra.mxu0 0.0
    %435 = vmatprep.subr.mxu0 0.0
    %436 = vmatpush1.msra.mxu0 0.0
    %437 = vmatprep.subr.mxu0 0.0
    %438 = vmatpush1.msra.mxu0 0.0
    %439 = vmatprep.subr.mxu0 0.0
    %440 = vmatpush1.msra.mxu0 0.0
    %441 = vmatprep.mubr.f32.mxu0 0.0
    %442 = vmatmul.mubr.f32.gmra.mrb[0].mxu0 %v375
    %v443 = vpop.f32.mrb[0].mxu0
    %v444 = vadd.f32 0.0, %v443
    %v445 = vpop.f32.mrb[0].mxu0
    %446 = vdwg.mxu0
    %v447 = vadd.f32 %v374, %v444
    %v448 = vxor.u32 %v447, 2147483648
    %v449 = vmul.f32 %v448, 1.442695
    %v450 = vpow.pop %v449
    %v451 = vadd.f32 %v450, 1.0
    %v452 = vrcp.pop %v451
    %v453 = vmul.f32 1.0, %v452
    %v454 = vtanh.pop %v447
    %v455 = vmul.f32 %v453, %v360
    %457 = vrot.lane.b32.xlu0 %v454, 64
    %v458 = vpop.permute.xlu0 %457
    %v460 = vmul.f32 %v453, %v458
    %462 = vrot.lane.b32.xlu0 %v460, 32
    %v463 = vpop.permute.xlu0 %462
    %v465 = vadd.f32 %v455, %v463
    %v466 = vtanh.pop %v465
    %468 = vrot.lane.b32.xlu0 %v466, 64
    %v469 = vpop.permute.xlu0 %468
    %v471 = vmul.f32 %v453, %v469
    %473 = vrot.lane.b32.xlu0 %v471, 32
    %v474 = vpop.permute.xlu0 %473
    %s476 = scalar_lea.vmem [#allocation9], 4
    %477 = vst.msk [vmem:[%s476] sm:$0x3] %vm266, %v474
    %s478 = scalar_lea.vmem [#allocation2], 6
    %v479 = vld [vmem:[%s478] sm:$0x3]
    %v480 = vsel %vm163, %v474, 0
    %482 = vmatprep.subr.mxu0 0.0
    %483 = vmatpush1.msra.mxu0 %v158
    %484 = vmatprep.subr.mxu0 0.0
    %485 = vmatpush1.msra.mxu0 %v159
    %486 = vmatprep.subr.mxu0 0.0
    %487 = vmatpush1.msra.mxu0 %v160
    %488 = vmatprep.subr.mxu0 0.0
    %489 = vmatpush1.msra.mxu0 %v161
    %490 = vmatprep.subr.mxu0 0.0
    %491 = vmatpush1.msra.mxu0 0.0
    %492 = vmatprep.subr.mxu0 0.0
    %493 = vmatpush1.msra.mxu0 0.0
    %494 = vmatprep.subr.mxu0 0.0
    %495 = vmatpush1.msra.mxu0 0.0
    %496 = vmatprep.subr.mxu0 0.0
    %497 = vmatpush1.msra.mxu0 0.0
    %498 = vmatprep.subr.mxu0 0.0
    %499 = vmatpush1.msra.mxu0 0.0
    %500 = vmatprep.subr.mxu0 0.0
    %501 = vmatpush1.msra.mxu0 0.0
    %502 = vmatprep.subr.mxu0 0.0
    %503 = vmatpush1.msra.mxu0 0.0
    %504 = vmatprep.subr.mxu0 0.0
    %505 = vmatpush1.msra.mxu0 0.0
    %506 = vmatprep.subr.mxu0 0.0
    %507 = vmatpush1.msra.mxu0 0.0
    %508 = vmatprep.subr.mxu0 0.0
    %509 = vmatpush1.msra.mxu0 0.0
    %510 = vmatprep.subr.mxu0 0.0
    %511 = vmatpush1.msra.mxu0 0.0
    %512 = vmatprep.subr.mxu0 0.0
    %513 = vmatpush1.msra.mxu0 0.0
    %514 = vmatprep.subr.mxu0 0.0
    %515 = vmatpush1.msra.mxu0 0.0
    %516 = vmatprep.subr.mxu0 0.0
    %517 = vmatpush1.msra.mxu0 0.0
    %518 = vmatprep.subr.mxu0 0.0
    %519 = vmatpush1.msra.mxu0 0.0
    %520 = vmatprep.subr.mxu0 0.0
    %521 = vmatpush1.msra.mxu0 0.0
    %522 = vmatprep.subr.mxu0 0.0
    %523 = vmatpush1.msra.mxu0 0.0
    %524 = vmatprep.subr.mxu0 0.0
    %525 = vmatpush1.msra.mxu0 0.0
    %526 = vmatprep.subr.mxu0 0.0
    %527 = vmatpush1.msra.mxu0 0.0
    %528 = vmatprep.subr.mxu0 0.0
    %529 = vmatpush1.msra.mxu0 0.0
    %530 = vmatprep.subr.mxu0 0.0
    %531 = vmatpush1.msra.mxu0 0.0
    %532 = vmatprep.subr.mxu0 0.0
    %533 = vmatpush1.msra.mxu0 0.0
    %534 = vmatprep.subr.mxu0 0.0
    %535 = vmatpush1.msra.mxu0 0.0
    %536 = vmatprep.subr.mxu0 0.0
    %537 = vmatpush1.msra.mxu0 0.0
    %538 = vmatprep.subr.mxu0 0.0
    %539 = vmatpush1.msra.mxu0 0.0
    %540 = vmatprep.subr.mxu0 0.0
    %541 = vmatpush1.msra.mxu0 0.0
    %542 = vmatprep.subr.mxu0 0.0
    %543 = vmatpush1.msra.mxu0 0.0
    %544 = vmatprep.subr.mxu0 0.0
    %545 = vmatpush1.msra.mxu0 0.0
    %546 = vmatprep.mubr.f32.mxu0 0.0
    %547 = vmatmul.mubr.f32.gmra.mrb[0].mxu0 %v480
    %v548 = vpop.f32.mrb[0].mxu0
    %v549 = vadd.f32 0.0, %v548
    %v550 = vpop.f32.mrb[0].mxu0
    %551 = vdwg.mxu0
    %v552 = vadd.f32 %v479, %v549
    %v553 = vxor.u32 %v552, 2147483648
    %v554 = vmul.f32 %v553, 1.442695
    %v555 = vpow.pop %v554
    %v556 = vadd.f32 %v555, 1.0
    %v557 = vrcp.pop %v556
    %v558 = vmul.f32 1.0, %v557
    %v559 = vtanh.pop %v552
    %v560 = vmul.f32 %v558, %v465
    %562 = vrot.lane.b32.xlu0 %v559, 64
    %v563 = vpop.permute.xlu0 %562
    %v565 = vmul.f32 %v558, %v563
    %567 = vrot.lane.b32.xlu0 %v565, 32
    %v568 = vpop.permute.xlu0 %567
    %v570 = vadd.f32 %v560, %v568
    %v571 = vtanh.pop %v570
    %573 = vrot.lane.b32.xlu0 %v571, 64
    %v574 = vpop.permute.xlu0 %573
    %v576 = vmul.f32 %v558, %v574
    %578 = vrot.lane.b32.xlu0 %v576, 32
    %v579 = vpop.permute.xlu0 %578
    %s581 = scalar_lea.vmem [#allocation9], 6
    %582 = vst.msk [vmem:[%s581] sm:$0x3] %vm266, %v579
    %s583 = scalar_lea.vmem [#allocation2], 8
    %v584 = vld [vmem:[%s583] sm:$0x3]
    %v585 = vsel %vm163, %v579, 0
    %587 = vmatprep.subr.mxu0 0.0
    %588 = vmatpush1.msra.mxu0 %v158
    %589 = vmatprep.subr.mxu0 0.0
    %590 = vmatpush1.msra.mxu0 %v159
    %591 = vmatprep.subr.mxu0 0.0
    %592 = vmatpush1.msra.mxu0 %v160
    %593 = vmatprep.subr.mxu0 0.0
    %594 = vmatpush1.msra.mxu0 %v161
    %595 = vmatprep.subr.mxu0 0.0
    %596 = vmatpush1.msra.mxu0 0.0
    %597 = vmatprep.subr.mxu0 0.0
    %598 = vmatpush1.msra.mxu0 0.0
    %599 = vmatprep.subr.mxu0 0.0
    %600 = vmatpush1.msra.mxu0 0.0
    %601 = vmatprep.subr.mxu0 0.0
    %602 = vmatpush1.msra.mxu0 0.0
    %603 = vmatprep.subr.mxu0 0.0
    %604 = vmatpush1.msra.mxu0 0.0
    %605 = vmatprep.subr.mxu0 0.0
    %606 = vmatpush1.msra.mxu0 0.0
    %607 = vmatprep.subr.mxu0 0.0
    %608 = vmatpush1.msra.mxu0 0.0
    %609 = vmatprep.subr.mxu0 0.0
    %610 = vmatpush1.msra.mxu0 0.0
    %611 = vmatprep.subr.mxu0 0.0
    %612 = vmatpush1.msra.mxu0 0.0
    %613 = vmatprep.subr.mxu0 0.0
    %614 = vmatpush1.msra.mxu0 0.0
    %615 = vmatprep.subr.mxu0 0.0
    %616 = vmatpush1.msra.mxu0 0.0
    %617 = vmatprep.subr.mxu0 0.0
    %618 = vmatpush1.msra.mxu0 0.0
    %619 = vmatprep.subr.mxu0 0.0
    %620 = vmatpush1.msra.mxu0 0.0
    %621 = vmatprep.subr.mxu0 0.0
    %622 = vmatpush1.msra.mxu0 0.0
    %623 = vmatprep.subr.mxu0 0.0
    %624 = vmatpush1.msra.mxu0 0.0
    %625 = vmatprep.subr.mxu0 0.0
    %626 = vmatpush1.msra.mxu0 0.0
    %627 = vmatprep.subr.mxu0 0.0
    %628 = vmatpush1.msra.mxu0 0.0
    %629 = vmatprep.subr.mxu0 0.0
    %630 = vmatpush1.msra.mxu0 0.0
    %631 = vmatprep.subr.mxu0 0.0
    %632 = vmatpush1.msra.mxu0 0.0
    %633 = vmatprep.subr.mxu0 0.0
    %634 = vmatpush1.msra.mxu0 0.0
    %635 = vmatprep.subr.mxu0 0.0
    %636 = vmatpush1.msra.mxu0 0.0
    %637 = vmatprep.subr.mxu0 0.0
    %638 = vmatpush1.msra.mxu0 0.0
    %639 = vmatprep.subr.mxu0 0.0
    %640 = vmatpush1.msra.mxu0 0.0
    %641 = vmatprep.subr.mxu0 0.0
    %642 = vmatpush1.msra.mxu0 0.0
    %643 = vmatprep.subr.mxu0 0.0
    %644 = vmatpush1.msra.mxu0 0.0
    %645 = vmatprep.subr.mxu0 0.0
    %646 = vmatpush1.msra.mxu0 0.0
    %647 = vmatprep.subr.mxu0 0.0
    %648 = vmatpush1.msra.mxu0 0.0
    %649 = vmatprep.subr.mxu0 0.0
    %650 = vmatpush1.msra.mxu0 0.0
    %651 = vmatprep.mubr.f32.mxu0 0.0
    %652 = vmatmul.mubr.f32.gmra.mrb[0].mxu0 %v585
    %v653 = vpop.f32.mrb[0].mxu0
    %v654 = vadd.f32 0.0, %v653
    %v655 = vpop.f32.mrb[0].mxu0
    %656 = vdwg.mxu0
    %v657 = vadd.f32 %v584, %v654
    %v658 = vxor.u32 %v657, 2147483648
    %v659 = vmul.f32 %v658, 1.442695
    %v660 = vpow.pop %v659
    %v661 = vadd.f32 %v660, 1.0
    %v662 = vrcp.pop %v661
    %v663 = vmul.f32 1.0, %v662
    %v664 = vtanh.pop %v657
    %v665 = vmul.f32 %v663, %v570
    %667 = vrot.lane.b32.xlu0 %v664, 64
    %v668 = vpop.permute.xlu0 %667
    %v670 = vmul.f32 %v663, %v668
    %672 = vrot.lane.b32.xlu0 %v670, 32
    %v673 = vpop.permute.xlu0 %672
    %v675 = vadd.f32 %v665, %v673
    %v676 = vtanh.pop %v675
    %678 = vrot.lane.b32.xlu0 %v676, 64
    %v679 = vpop.permute.xlu0 %678
    %v681 = vmul.f32 %v663, %v679
    %683 = vrot.lane.b32.xlu0 %v681, 32
    %v684 = vpop.permute.xlu0 %683
    %s686 = scalar_lea.vmem [#allocation9], 8
    %687 = vst.msk [vmem:[%s686] sm:$0x3] %vm266, %v684
    %s688 = scalar_lea.vmem [#allocation2], 10
    %v689 = vld [vmem:[%s688] sm:$0x3]
    %v690 = vsel %vm163, %v684, 0
    %692 = vmatprep.subr.mxu0 0.0
    %693 = vmatpush1.msra.mxu0 %v158
    %694 = vmatprep.subr.mxu0 0.0
    %695 = vmatpush1.msra.mxu0 %v159
    %696 = vmatprep.subr.mxu0 0.0
    %697 = vmatpush1.msra.mxu0 %v160
    %698 = vmatprep.subr.mxu0 0.0
    %699 = vmatpush1.msra.mxu0 %v161
    %700 = vmatprep.subr.mxu0 0.0
    %701 = vmatpush1.msra.mxu0 0.0
    %702 = vmatprep.subr.mxu0 0.0
    %703 = vmatpush1.msra.mxu0 0.0
    %704 = vmatprep.subr.mxu0 0.0
    %705 = vmatpush1.msra.mxu0 0.0
    %706 = vmatprep.subr.mxu0 0.0
    %707 = vmatpush1.msra.mxu0 0.0
    %708 = vmatprep.subr.mxu0 0.0
    %709 = vmatpush1.msra.mxu0 0.0
    %710 = vmatprep.subr.mxu0 0.0
    %711 = vmatpush1.msra.mxu0 0.0
    %712 = vmatprep.subr.mxu0 0.0
    %713 = vmatpush1.msra.mxu0 0.0
    %714 = vmatprep.subr.mxu0 0.0
    %715 = vmatpush1.msra.mxu0 0.0
    %716 = vmatprep.subr.mxu0 0.0
    %717 = vmatpush1.msra.mxu0 0.0
    %718 = vmatprep.subr.mxu0 0.0
    %719 = vmatpush1.msra.mxu0 0.0
    %720 = vmatprep.subr.mxu0 0.0
    %721 = vmatpush1.msra.mxu0 0.0
    %722 = vmatprep.subr.mxu0 0.0
    %723 = vmatpush1.msra.mxu0 0.0
    %724 = vmatprep.subr.mxu0 0.0
    %725 = vmatpush1.msra.mxu0 0.0
    %726 = vmatprep.subr.mxu0 0.0
    %727 = vmatpush1.msra.mxu0 0.0
    %728 = vmatprep.subr.mxu0 0.0
    %729 = vmatpush1.msra.mxu0 0.0
    %730 = vmatprep.subr.mxu0 0.0
    %731 = vmatpush1.msra.mxu0 0.0
    %732 = vmatprep.subr.mxu0 0.0
    %733 = vmatpush1.msra.mxu0 0.0
    %734 = vmatprep.subr.mxu0 0.0
    %735 = vmatpush1.msra.mxu0 0.0
    %736 = vmatprep.subr.mxu0 0.0
    %737 = vmatpush1.msra.mxu0 0.0
    %738 = vmatprep.subr.mxu0 0.0
    %739 = vmatpush1.msra.mxu0 0.0
    %740 = vmatprep.subr.mxu0 0.0
    %741 = vmatpush1.msra.mxu0 0.0
    %742 = vmatprep.subr.mxu0 0.0
    %743 = vmatpush1.msra.mxu0 0.0
    %744 = vmatprep.subr.mxu0 0.0
    %745 = vmatpush1.msra.mxu0 0.0
    %746 = vmatprep.subr.mxu0 0.0
    %747 = vmatpush1.msra.mxu0 0.0
    %748 = vmatprep.subr.mxu0 0.0
    %749 = vmatpush1.msra.mxu0 0.0
    %750 = vmatprep.subr.mxu0 0.0
    %751 = vmatpush1.msra.mxu0 0.0
    %752 = vmatprep.subr.mxu0 0.0
    %753 = vmatpush1.msra.mxu0 0.0
    %754 = vmatprep.subr.mxu0 0.0
    %755 = vmatpush1.msra.mxu0 0.0
    %756 = vmatprep.mubr.f32.mxu0 0.0
    %757 = vmatmul.mubr.f32.gmra.mrb[0].mxu0 %v690
    %v758 = vpop.f32.mrb[0].mxu0
    %v759 = vadd.f32 0.0, %v758
    %v760 = vpop.f32.mrb[0].mxu0
    %761 = vdwg.mxu0
    %v762 = vadd.f32 %v689, %v759
    %v763 = vxor.u32 %v762, 2147483648
    %v764 = vmul.f32 %v763, 1.442695
    %v765 = vpow.pop %v764
    %v766 = vadd.f32 %v765, 1.0
    %v767 = vrcp.pop %v766
    %v768 = vmul.f32 1.0, %v767
    %v769 = vtanh.pop %v762
    %v770 = vmul.f32 %v768, %v675
    %772 = vrot.lane.b32.xlu0 %v769, 64
    %v773 = vpop.permute.xlu0 %772
    %v775 = vmul.f32 %v768, %v773
    %777 = vrot.lane.b32.xlu0 %v775, 32
    %v778 = vpop.permute.xlu0 %777
    %v780 = vadd.f32 %v770, %v778
    %v781 = vtanh.pop %v780
    %783 = vrot.lane.b32.xlu0 %v781, 64
    %v784 = vpop.permute.xlu0 %783
    %v786 = vmul.f32 %v768, %v784
    %788 = vrot.lane.b32.xlu0 %v786, 32
    %v789 = vpop.permute.xlu0 %788
    %s791 = scalar_lea.vmem [#allocation9], 10
    %792 = vst.msk [vmem:[%s791] sm:$0x3] %vm266, %v789
    %s793 = scalar_lea.vmem [#allocation2], 12
    %v794 = vld [vmem:[%s793] sm:$0x3]
    %v795 = vsel %vm163, %v789, 0
    %797 = vmatprep.subr.mxu0 0.0
    %798 = vmatpush1.msra.mxu0 %v158
    %799 = vmatprep.subr.mxu0 0.0
    %800 = vmatpush1.msra.mxu0 %v159
    %801 = vmatprep.subr.mxu0 0.0
    %802 = vmatpush1.msra.mxu0 %v160
    %803 = vmatprep.subr.mxu0 0.0
    %804 = vmatpush1.msra.mxu0 %v161
    %805 = vmatprep.subr.mxu0 0.0
    %806 = vmatpush1.msra.mxu0 0.0
    %807 = vmatprep.subr.mxu0 0.0
    %808 = vmatpush1.msra.mxu0 0.0
    %809 = vmatprep.subr.mxu0 0.0
    %810 = vmatpush1.msra.mxu0 0.0
    %811 = vmatprep.subr.mxu0 0.0
    %812 = vmatpush1.msra.mxu0 0.0
    %813 = vmatprep.subr.mxu0 0.0
    %814 = vmatpush1.msra.mxu0 0.0
    %815 = vmatprep.subr.mxu0 0.0
    %816 = vmatpush1.msra.mxu0 0.0
    %817 = vmatprep.subr.mxu0 0.0
    %818 = vmatpush1.msra.mxu0 0.0
    %819 = vmatprep.subr.mxu0 0.0
    %820 = vmatpush1.msra.mxu0 0.0
    %821 = vmatprep.subr.mxu0 0.0
    %822 = vmatpush1.msra.mxu0 0.0
    %823 = vmatprep.subr.mxu0 0.0
    %824 = vmatpush1.msra.mxu0 0.0
    %825 = vmatprep.subr.mxu0 0.0
    %826 = vmatpush1.msra.mxu0 0.0
    %827 = vmatprep.subr.mxu0 0.0
    %828 = vmatpush1.msra.mxu0 0.0
    %829 = vmatprep.subr.mxu0 0.0
    %830 = vmatpush1.msra.mxu0 0.0
    %831 = vmatprep.subr.mxu0 0.0
    %832 = vmatpush1.msra.mxu0 0.0
    %833 = vmatprep.subr.mxu0 0.0
    %834 = vmatpush1.msra.mxu0 0.0
    %835 = vmatprep.subr.mxu0 0.0
    %836 = vmatpush1.msra.mxu0 0.0
    %837 = vmatprep.subr.mxu0 0.0
    %838 = vmatpush1.msra.mxu0 0.0
    %839 = vmatprep.subr.mxu0 0.0
    %840 = vmatpush1.msra.mxu0 0.0
    %841 = vmatprep.subr.mxu0 0.0
    %842 = vmatpush1.msra.mxu0 0.0
    %843 = vmatprep.subr.mxu0 0.0
    %844 = vmatpush1.msra.mxu0 0.0
    %845 = vmatprep.subr.mxu0 0.0
    %846 = vmatpush1.msra.mxu0 0.0
    %847 = vmatprep.subr.mxu0 0.0
    %848 = vmatpush1.msra.mxu0 0.0
    %849 = vmatprep.subr.mxu0 0.0
    %850 = vmatpush1.msra.mxu0 0.0
    %851 = vmatprep.subr.mxu0 0.0
    %852 = vmatpush1.msra.mxu0 0.0
    %853 = vmatprep.subr.mxu0 0.0
    %854 = vmatpush1.msra.mxu0 0.0
    %855 = vmatprep.subr.mxu0 0.0
    %856 = vmatpush1.msra.mxu0 0.0
    %857 = vmatprep.subr.mxu0 0.0
    %858 = vmatpush1.msra.mxu0 0.0
    %859 = vmatprep.subr.mxu0 0.0
    %860 = vmatpush1.msra.mxu0 0.0
    %861 = vmatprep.mubr.f32.mxu0 0.0
    %862 = vmatmul.mubr.f32.gmra.mrb[0].mxu0 %v795
    %v863 = vpop.f32.mrb[0].mxu0
    %v864 = vadd.f32 0.0, %v863
    %v865 = vpop.f32.mrb[0].mxu0
    %866 = vdwg.mxu0
    %v867 = vadd.f32 %v794, %v864
    %v868 = vxor.u32 %v867, 2147483648
    %v869 = vmul.f32 %v868, 1.442695
    %v870 = vpow.pop %v869
    %v871 = vadd.f32 %v870, 1.0
    %v872 = vrcp.pop %v871
    %v873 = vmul.f32 1.0, %v872
    %v874 = vtanh.pop %v867
    %v875 = vmul.f32 %v873, %v780
    %877 = vrot.lane.b32.xlu0 %v874, 64
    %v878 = vpop.permute.xlu0 %877
    %v880 = vmul.f32 %v873, %v878
    %882 = vrot.lane.b32.xlu0 %v880, 32
    %v883 = vpop.permute.xlu0 %882
    %v885 = vadd.f32 %v875, %v883
    %v886 = vtanh.pop %v885
    %888 = vrot.lane.b32.xlu0 %v886, 64
    %v889 = vpop.permute.xlu0 %888
    %v891 = vmul.f32 %v873, %v889
    %893 = vrot.lane.b32.xlu0 %v891, 32
    %v894 = vpop.permute.xlu0 %893
    %s896 = scalar_lea.vmem [#allocation9], 12
    %897 = vst.msk [vmem:[%s896] sm:$0x3] %vm266, %v894
    %s898 = scalar_lea.vmem [#allocation2], 14
    %v899 = vld [vmem:[%s898] sm:$0x3]
    %v900 = vsel %vm163, %v894, 0
    %902 = vmatprep.subr.mxu0 0.0
    %903 = vmatpush1.msra.mxu0 %v158
    %904 = vmatprep.subr.mxu0 0.0
    %905 = vmatpush1.msra.mxu0 %v159
    %906 = vmatprep.subr.mxu0 0.0
    %907 = vmatpush1.msra.mxu0 %v160
    %908 = vmatprep.subr.mxu0 0.0
    %909 = vmatpush1.msra.mxu0 %v161
    %910 = vmatprep.subr.mxu0 0.0
    %911 = vmatpush1.msra.mxu0 0.0
    %912 = vmatprep.subr.mxu0 0.0
    %913 = vmatpush1.msra.mxu0 0.0
    %914 = vmatprep.subr.mxu0 0.0
    %915 = vmatpush1.msra.mxu0 0.0
    %916 = vmatprep.subr.mxu0 0.0
    %917 = vmatpush1.msra.mxu0 0.0
    %918 = vmatprep.subr.mxu0 0.0
    %919 = vmatpush1.msra.mxu0 0.0
    %920 = vmatprep.subr.mxu0 0.0
    %921 = vmatpush1.msra.mxu0 0.0
    %922 = vmatprep.subr.mxu0 0.0
    %923 = vmatpush1.msra.mxu0 0.0
    %924 = vmatprep.subr.mxu0 0.0
    %925 = vmatpush1.msra.mxu0 0.0
    %926 = vmatprep.subr.mxu0 0.0
    %927 = vmatpush1.msra.mxu0 0.0
    %928 = vmatprep.subr.mxu0 0.0
    %929 = vmatpush1.msra.mxu0 0.0
    %930 = vmatprep.subr.mxu0 0.0
    %931 = vmatpush1.msra.mxu0 0.0
    %932 = vmatprep.subr.mxu0 0.0
    %933 = vmatpush1.msra.mxu0 0.0
    %934 = vmatprep.subr.mxu0 0.0
    %935 = vmatpush1.msra.mxu0 0.0
    %936 = vmatprep.subr.mxu0 0.0
    %937 = vmatpush1.msra.mxu0 0.0
    %938 = vmatprep.subr.mxu0 0.0
    %939 = vmatpush1.msra.mxu0 0.0
    %940 = vmatprep.subr.mxu0 0.0
    %941 = vmatpush1.msra.mxu0 0.0
    %942 = vmatprep.subr.mxu0 0.0
    %943 = vmatpush1.msra.mxu0 0.0
    %944 = vmatprep.subr.mxu0 0.0
    %945 = vmatpush1.msra.mxu0 0.0
    %946 = vmatprep.subr.mxu0 0.0
    %947 = vmatpush1.msra.mxu0 0.0
    %948 = vmatprep.subr.mxu0 0.0
    %949 = vmatpush1.msra.mxu0 0.0
    %950 = vmatprep.subr.mxu0 0.0
    %951 = vmatpush1.msra.mxu0 0.0
    %952 = vmatprep.subr.mxu0 0.0
    %953 = vmatpush1.msra.mxu0 0.0
    %954 = vmatprep.subr.mxu0 0.0
    %955 = vmatpush1.msra.mxu0 0.0
    %956 = vmatprep.subr.mxu0 0.0
    %957 = vmatpush1.msra.mxu0 0.0
    %958 = vmatprep.subr.mxu0 0.0
    %959 = vmatpush1.msra.mxu0 0.0
    %960 = vmatprep.subr.mxu0 0.0
    %961 = vmatpush1.msra.mxu0 0.0
    %962 = vmatprep.subr.mxu0 0.0
    %963 = vmatpush1.msra.mxu0 0.0
    %964 = vmatprep.subr.mxu0 0.0
    %965 = vmatpush1.msra.mxu0 0.0
    %966 = vmatprep.mubr.f32.mxu0 0.0
    %967 = vmatmul.mubr.f32.gmra.mrb[0].mxu0 %v900
    %v968 = vpop.f32.mrb[0].mxu0
    %v969 = vadd.f32 0.0, %v968
    %v970 = vpop.f32.mrb[0].mxu0
    %971 = vdwg.mxu0
    %v972 = vadd.f32 %v899, %v969
    %v973 = vxor.u32 %v972, 2147483648
    %v974 = vmul.f32 %v973, 1.442695
    %v975 = vpow.pop %v974
    %v976 = vadd.f32 %v975, 1.0
    %v977 = vrcp.pop %v976
    %v978 = vmul.f32 1.0, %v977
    %v979 = vtanh.pop %v972
    %v980 = vmul.f32 %v978, %v885
    %982 = vrot.lane.b32.xlu0 %v979, 64
    %v983 = vpop.permute.xlu0 %982
    %v985 = vmul.f32 %v978, %v983
    %987 = vrot.lane.b32.xlu0 %v985, 32
    %v988 = vpop.permute.xlu0 %987
    %v990 = vadd.f32 %v980, %v988
    %v991 = vtanh.pop %v990
    %993 = vrot.lane.b32.xlu0 %v991, 64
    %v994 = vpop.permute.xlu0 %993
    %v996 = vmul.f32 %v978, %v994
    %998 = vrot.lane.b32.xlu0 %v996, 32
    %v999 = vpop.permute.xlu0 %998
    %s1001 = scalar_lea.vmem [#allocation9], 14
    %1002 = vst.msk [vmem:[%s1001] sm:$0x3] %vm266, %v999
    %1003 = vst.msk [vmem:[#allocation10] sm:$0x3] %vm266, %v999
    %1005 = vrot.lane.b32.xlu0 %v990, 96
    %v1006 = vpop.permute.xlu0 %1005
    %1008 = vst.msk [vmem:[#allocation12] sm:$0x3] %vm266, %v1006
    // Predicated region
    $region30: #{tpu_custom_call.1} parent=1 // pred_check
      _
    $region31: #{tpu_custom_call.1} parent=1 // pred_check_branch
      %1010 = sbr.rel (0) target = $region33
    $region32: #{tpu_custom_call.1} parent=1 // pred_region
      %s1012 = ssub.s32 256, 256
      %1013 = vsyncadd [#allocation5], %s1012
      %s1014 = sshll.u32 [#allocation9], 4
      %s1015 = int_to_ptr.vmem [resolvable:$true] %s1014
      %1020 = dma.vmem_to_hbm [thread:$0]  %s1015, 256, %s4, [#allocation5], 32, 32, 2
    $region33: #{tpu_custom_call.1} parent=1 // pred_fallthru
      _
    // Predicated region
    $region34: #{tpu_custom_call.1} parent=1 // pred_check
      _
    $region35: #{tpu_custom_call.1} parent=1 // pred_check_branch
      %1022 = sbr.rel (0) target = $region37
    $region36: #{tpu_custom_call.1} parent=1 // pred_region
      %s1024 = ssub.s32 32, 32
      %1025 = vsyncadd [#allocation11], %s1024
      %s1027 = sshll.u32 [#allocation10], 4
      %s1028 = int_to_ptr.vmem [resolvable:$true] %s1027
      %1030 = dma.vmem_to_hbm [thread:$0]  %s1028, 32, %s5, [#allocation11]
    $region37: #{tpu_custom_call.1} parent=1 // pred_fallthru
      _
    // Predicated region
    $region38: #{tpu_custom_call.1} parent=1 // pred_check
      _
    $region39: #{tpu_custom_call.1} parent=1 // pred_check_branch
      %1032 = sbr.rel (0) target = $region41
    $region40: #{tpu_custom_call.1} parent=1 // pred_region
      %s1034 = ssub.s32 32, 32
      %1035 = vsyncadd [#allocation11], %s1034
      %s1037 = sshll.u32 [#allocation12], 4
      %s1038 = int_to_ptr.vmem [resolvable:$true] %s1037
      %1040 = dma.vmem_to_hbm [thread:$0]  %s1038, 32, %s6, [#allocation11]
    $region41: #{tpu_custom_call.1} parent=1 // pred_fallthru
      _
    // Predicated region
    $region42: #{tpu_custom_call.1} parent=1 // pred_check
      _
    $region43: #{tpu_custom_call.1} parent=1 // pred_check_branch
      %1042 = sbr.rel (0) target = $region45
    $region44: #{tpu_custom_call.1} parent=1 // pred_region
      %1043 = dma.done [#allocation5], 256
    $region45: #{tpu_custom_call.1} parent=1 // pred_fallthru
      _
    // Predicated region
    $region46: #{tpu_custom_call.1} parent=1 // pred_check
      _
    $region47: #{tpu_custom_call.1} parent=1 // pred_check_branch
      %1045 = sbr.rel (0) target = $region49
    $region48: #{tpu_custom_call.1} parent=1 // pred_region
      %1046 = dma.done [#allocation11], 32
    $region49: #{tpu_custom_call.1} parent=1 // pred_fallthru
      _
    // Predicated region
    $region50: #{tpu_custom_call.1} parent=1 // pred_check
      _
    $region51: #{tpu_custom_call.1} parent=1 // pred_check_branch
      %1048 = sbr.rel (0) target = $region53
    $region52: #{tpu_custom_call.1} parent=1 // pred_region
      %1049 = dma.done [#allocation11], 32
    $region53: #{tpu_custom_call.1} parent=1 // pred_fallthru
      _
    %1050 = vsyncpa [#allocation4], 1
    %1051 = vsyncpa [#allocation7], 1
    %1052 = vsyncpa [#allocation5], 1
    %1053 = vsyncpa [#allocation11], 1

</llo_original>
